<compile_context>
chip_gen: v7x
topology: tpu7x:2x2x1
jax: 0.10.0
libtpu: 0.0.40
codegen_flags: <defaults>
</compile_context>

<pallas_src>
import functools

import jax
import jax.numpy as jnp
from jax.experimental import pallas as pl
from jax.experimental.pallas import tpu as pltpu

_F32_MAX = float(jnp.finfo(jnp.float32).max)
_MIB = 1024 * 1024


def _round_up(v, m):
    return ((v + m - 1) // m) * m


def _vmem_limit_bytes():
    """Generation-aware scoped-VMEM limit (v5e/v6e: 128 MiB phys, v7x: 64 MiB)."""
    cap = 64 * _MIB
    try:
        cap = int(getattr(pltpu.get_tpu_info(), "vmem_capacity_bytes", cap)) or cap
    except Exception:
        pass
    # Leave Mosaic headroom: 128 MiB -> 96 MiB, 64 MiB (v7x) -> 40 MiB.
    return int(max(min(cap - 24 * _MIB, 96 * _MIB), cap // 2))


def _stats_f_tile(batch, feats, x_itemsize, vmem_limit):
    """Feature-tile width for the stats/mask kernel (lane-dense, VMEM-bounded by B)."""
    if feats <= 128:
        return feats                         # block == full array dims
    f_pad = _round_up(feats, 128)
    # Per-step VMEM: double-buffered (B, ft) x block + two in-kernel f32
    # temporaries (cast + centered copy).  Keep well under the scoped limit.
    budget = min(vmem_limit // 3, 16 * _MIB)
    ft = 512
    while ft > 128 and batch * ft * (2 * x_itemsize + 8) > budget:
        ft //= 2
    ft = min(ft, f_pad)
    # TODO(synk): for B >~ 8192 replace the whole-batch (B, ft) block with a
    # second "arbitrary" batch grid axis that accumulates sum/cov/var into a
    # VMEM scratch (pl.when init/finalize) to remove the VMEM ceiling on v7x.
    # Give v7x's two TensorCores at least 2 parallel grid steps when possible.
    if pl.cdiv(feats, ft) < 2 and f_pad >= 256:
        ft = max(128, (f_pad // 256) * 128)
    return ft


def _apply_tiles(batch, feats, x_itemsize, vmem_limit):
    """(batch, feature) tile for the streaming apply kernel (reach HBM roofline)."""
    f_pad = _round_up(feats, 128)
    bt = batch if batch <= 512 else 512
    budget = min(vmem_limit // 2, 24 * _MIB)
    if feats <= 128:
        ft = feats
    else:
        ft = 128
        for cand in (1024, 512, 256, 128):
            if cand <= f_pad and bt * cand * (4 * x_itemsize + 4) <= budget:
                ft = cand
                break
    # Keep >= 2 grid steps so v7x's second TensorCore is not idle.
    if pl.cdiv(batch, bt) * pl.cdiv(feats, ft) < 2 and batch >= 16:
        bt = _round_up(pl.cdiv(batch, 2), 8)
    return bt, ft


# ---------------------------------------------------------------------------
# Pass 1: per-neuron correlation with the targets -> {0,1} keep-mask row.
# ---------------------------------------------------------------------------
def _mask_kernel(a_ref, x_ref, u_ref, mask_ref, *, p, beta, inv_b):
    """a_ref: (2,B) f32 = [ones; (t-mean_t)/sqrt(var_t)] (target stats hoisted).
    x_ref: (B, Ft) native dtype.  u_ref / mask_ref: (1, Ft) f32."""
    x = x_ref[...].astype(jnp.float32)        # per-tile cast; x stays native in HBM
    a = a_ref[...]
    ones_row = a[0:1, :]                      # (1, B)
    tcs_row = a[1:2, :]                       # (1, B), centered & 1/sqrt(var_t)-scaled

    # Batch reductions on the MXU (three small (1,B)@(B,Ft) matmuls) instead
    # of VALU/XLU sublane-reduce chains.  Centering the tile first avoids the
    # catastrophic cancellation of sum(xx) - mean*sum(x) when |mean| >> std.
    dot = functools.partial(jnp.dot, preferred_element_type=jnp.float32,
                            precision=jax.lax.Precision.HIGHEST)
    sum_x = dot(ones_row, x)                  # (1, Ft)
    xc = x - sum_x * inv_b                    # centered activations
    cov = dot(tcs_row, xc)                    # (1, Ft): sum(xc * tc) / sqrt(var_t)
    var_x = dot(ones_row, xc * xc)            # (1, Ft): sum(xc^2) >= 0

    # corr = cov / (sqrt(var_x) * sqrt(var_t)); 1/sqrt(var_t) already folded
    # into tcs_row.  rsqrt lands on the EUP slot (free alongside VPU work).
    corr = cov * jax.lax.rsqrt(var_x)         # NaN where var_x == 0 (cov == 0 there)

    # torch.nan_to_num: NaN -> 0, +/-Inf -> +/-float32 max.
    correlations = (1.0 + corr) * 0.5
    correlations = jnp.where(jnp.isnan(correlations), 0.0, correlations)
    correlations = jnp.clip(correlations, -_F32_MAX, _F32_MAX)

    probabilities = beta * (1.0 - correlations) + (1.0 - beta) * p
    mask_ref[...] = (u_ref[...] >= probabilities).astype(mask_ref.dtype)


# ---------------------------------------------------------------------------
# Pass 2: streaming apply, out = x * mask * probability (native-dtype store).
# ---------------------------------------------------------------------------
def _apply_kernel(prob_ref, x_ref, m_ref, o_ref):
    prob = prob_ref[0, 0]                     # global zero-fraction from SMEM
    scale = m_ref[...] * prob                 # (1, Ft) f32, tiny
    # Compute in f32 in-register (v5e VPU has no bf16) and store natively.
    o_ref[...] = (x_ref[...].astype(jnp.float32) * scale).astype(o_ref.dtype)


def hybrid_dropout(x, targets, uniform_noise, *, p=0.5, beta=0.1, training=True):
    """x: (B, F) float (any float dtype), targets: (B,), uniform_noise: (F,)."""
    if p < 0 or p > 1:
        raise ValueError("p must be a probability")
    if not training:
        return x
    # TODO(synk): the PyTorch module raises ValueError on NaN inputs; a
    # host-blocking jnp.isnan(x).any() pre-scan is deliberately omitted (extra
    # HBM pass + device->host sync + breaks jit).  NaNs propagate instead.

    B, F = x.shape
    itemsize = jnp.dtype(x.dtype).itemsize
    vmem_limit = _vmem_limit_bytes()

    # O(B) target statistics hoisted out of the kernel, folded into a single
    # normalized operand: a = [ones; (t - mean_t) / sqrt(sum((t - mean_t)^2))].
    t = jnp.asarray(targets, jnp.float32).reshape(B)
    tc = t - jnp.mean(t)
    tcs = tc * jax.lax.rsqrt(jnp.sum(tc * tc))          # NaN if targets constant
    a_mat = jnp.stack([jnp.ones((B,), jnp.float32), tcs], axis=0)   # (2, B)

    u2d = jnp.asarray(uniform_noise, jnp.float32).reshape(1, F)

    # ---- pass 1: per-neuron correlation -> keep-mask row (1, F) ----
    ft1 = _stats_f_tile(B, F, itemsize, vmem_limit)
    mask_row = pl.pallas_call(
        functools.partial(_mask_kernel, p=float(p), beta=float(beta),
                          inv_b=1.0 / float(B)),
        out_shape=jax.ShapeDtypeStruct((1, F), jnp.float32),
        grid=(pl.cdiv(F, ft1),),
        in_specs=[
            pl.BlockSpec((2, B), lambda j: (0, 0)),        # target operand (resident)
            pl.BlockSpec((B, ft1), lambda j: (0, j)),      # x tile, native dtype
            pl.BlockSpec((1, ft1), lambda j: (0, j)),      # uniform noise tile
        ],
        out_specs=pl.BlockSpec((1, ft1), lambda j: (0, j)),
        compiler_params=pltpu.CompilerParams(
            dimension_semantics=("parallel",),
            vmem_limit_bytes=vmem_limit),
    )(a_mat, x, u2d)

    # ---- tiny O(F) glue: global zero-fraction as a (1,1) SMEM scalar ----
    no_zeros = jnp.sum(mask_row)
    probability = (jnp.float32(F) - no_zeros) / jnp.float32(F)
    prob_arr = probability.reshape(1, 1).astype(jnp.float32)

    # ---- pass 2: mem-bound out = x * mask * probability (native dtype) ----
    bt, ft2 = _apply_tiles(B, F, itemsize, vmem_limit)
    out = pl.pallas_call(
        _apply_kernel,
        out_shape=jax.ShapeDtypeStruct((B, F), x.dtype),   # no wrapper cast pass
        grid=(pl.cdiv(B, bt), pl.cdiv(F, ft2)),
        in_specs=[
            pl.BlockSpec(memory_space=pltpu.MemorySpace.SMEM),   # probability scalar
            pl.BlockSpec((bt, ft2), lambda i, j: (i, j)),
            pl.BlockSpec((1, ft2), lambda i, j: (0, j)),
        ],
        out_specs=pl.BlockSpec((bt, ft2), lambda i, j: (i, j)),
        compiler_params=pltpu.CompilerParams(
            dimension_semantics=("parallel", "parallel"),
            vmem_limit_bytes=vmem_limit),
    )(prob_arr, x, mask_row)
    return out


def hybrid_dropout_ref(x, targets, uniform_noise, *, p=0.5, beta=0.1):
    """Pure-JAX reference mirroring the PyTorch forward, for verification."""
    B, F = x.shape
    xf = x.astype(jnp.float32)
    t = jnp.asarray(targets, jnp.float32)
    xc = xf - xf.mean(axis=0)
    tc = (t - t.mean())[:, None]
    corr = (xc * tc).sum(axis=0) / jnp.sqrt((xc * xc).sum(axis=0) * (tc * tc).sum())
    correlations = jnp.nan_to_num((1.0 + corr) / 2.0)
    probs = beta * (1.0 - correlations) + (1.0 - beta) * p
    mask = (jnp.asarray(uniform_noise, jnp.float32) >= probs).astype(jnp.float32)
    probability = (F - mask.sum()) / F
    return xf * mask[None, :] * probability


if __name__ == "__main__":
    def _run_case(B, F, dtype, mean_offset=0.0, tol=1e-5):
        key = jax.random.PRNGKey(0)
        k1, k2, k3 = jax.random.split(key, 3)
        x = (jax.random.normal(k1, (B, F), dtype=jnp.float32) + mean_offset).astype(dtype)
        targets = jax.random.randint(k2, (B,), 0, 5).astype(jnp.float32)  # ordinal labels
        u = jax.random.uniform(k3, (F,), dtype=jnp.float32)               # .uniform_(0,1)
        fn = jax.jit(functools.partial(hybrid_dropout, p=0.5, beta=0.1, training=True))
        out = jax.block_until_ready(fn(x, targets, u))
        assert out.shape == (B, F) and out.dtype == dtype
        ref = hybrid_dropout_ref(x, targets, u, p=0.5, beta=0.1)
        assert jnp.allclose(out.astype(jnp.float32), ref, atol=tol, rtol=tol), \
            f"mismatch vs reference at B={B}, F={F}, dtype={dtype}"

    # Small FC-head-like shape (the module's real use case).
    _run_case(8, 32, jnp.float32)
    # Ragged feature count (F % 128 != 0) + large feature mean: exercises the
    # cdiv edge-block path and the centered correlation math.
    _run_case(16, 200, jnp.float32, mean_offset=100.0)
    # bf16 activations: native-dtype load/store path (no wrapper casts).
    _run_case(32, 160, jnp.bfloat16, tol=2e-2)

    print("KERNEL_OK")
</pallas_src>

<mosaic_0001>
module attributes {stable_mosaic.version = 11 : i64} {
  func.func @_mask_kernel(%arg0: i32, %arg1: memref<2x8xf32, #tpu.memory_space<vmem>>, %arg2: memref<8x32xf32, #tpu.memory_space<vmem>>, %arg3: memref<1x32xf32, #tpu.memory_space<vmem>>, %arg4: memref<1x32xf32, #tpu.memory_space<vmem>>) attributes {dimension_semantics = [#tpu.dimension_semantics<parallel>], iteration_bounds = array<i64: 1>, scalar_prefetch = 0 : i64, scratch_operands = 0 : i64, tpu.core_type = #tpu.core_type<tc>, window_params = [{pipeline_mode = #tpu.pipeline_mode<synchronous>, transform_indices = @transform_0, window_bounds = array<i64: 2, 8>}, {transform_indices = @transform_1, window_bounds = array<i64: 8, 32>}, {transform_indices = @transform_2, window_bounds = array<i64: 1, 32>}, {transform_indices = @transform_3, window_bounds = array<i64: 1, 32>}]} {
    %c0 = arith.constant 0 : index
    %c0_0 = arith.constant 0 : index
    %0 = vector.load %arg2[%c0, %c0_0] : memref<8x32xf32, #tpu.memory_space<vmem>>, vector<8x32xf32>
    %c0_1 = arith.constant 0 : index
    %c0_2 = arith.constant 0 : index
    %1 = vector.load %arg1[%c0_1, %c0_2] : memref<2x8xf32, #tpu.memory_space<vmem>>, vector<2x8xf32>
    %2 = vector.extract_strided_slice %1 {offsets = [0, 0], sizes = [1, 8], strides = [1, 1]} : vector<2x8xf32> to vector<1x8xf32>
    %3 = vector.extract_strided_slice %1 {offsets = [1, 0], sizes = [1, 8], strides = [1, 1]} : vector<2x8xf32> to vector<1x8xf32>
    %cst = arith.constant dense<0.000000e+00> : vector<1x32xf32>
    %4 = tpu.matmul %2, %0, %cst {dimension_numbers = #tpu.dot_dimension_numbers<[1], [0], [0], [1], [0, 0, 1, 1], [], []>, precision = #tpu.contract_precision<fp32>} : vector<1x8xf32>, vector<8x32xf32>, vector<1x32xf32> -> vector<1x32xf32>
    %cst_3 = arith.constant 1.250000e-01 : f32
    %5 = vector.broadcast %cst_3 : f32 to vector<1x32xf32>
    %6 = arith.mulf %4, %5 : vector<1x32xf32>
    %7 = vector.broadcast %6 : vector<1x32xf32> to vector<8x32xf32>
    %8 = arith.subf %0, %7 : vector<8x32xf32>
    %cst_4 = arith.constant dense<0.000000e+00> : vector<1x32xf32>
    %9 = tpu.matmul %3, %8, %cst_4 {dimension_numbers = #tpu.dot_dimension_numbers<[1], [0], [0], [1], [0, 0, 1, 1], [], []>, precision = #tpu.contract_precision<fp32>} : vector<1x8xf32>, vector<8x32xf32>, vector<1x32xf32> -> vector<1x32xf32>
    %10 = arith.mulf %8, %8 : vector<8x32xf32>
    %cst_5 = arith.constant dense<0.000000e+00> : vector<1x32xf32>
    %11 = tpu.matmul %2, %10, %cst_5 {dimension_numbers = #tpu.dot_dimension_numbers<[1], [0], [0], [1], [0, 0, 1, 1], [], []>, precision = #tpu.contract_precision<fp32>} : vector<1x8xf32>, vector<8x32xf32>, vector<1x32xf32> -> vector<1x32xf32>
    %12 = math.rsqrt %11 : vector<1x32xf32>
    %13 = arith.mulf %9, %12 : vector<1x32xf32>
    %cst_6 = arith.constant 1.000000e+00 : f32
    %14 = vector.broadcast %cst_6 : f32 to vector<1x32xf32>
    %15 = arith.addf %14, %13 : vector<1x32xf32>
    %cst_7 = arith.constant 5.000000e-01 : f32
    %16 = vector.broadcast %cst_7 : f32 to vector<1x32xf32>
    %17 = arith.mulf %15, %16 : vector<1x32xf32>
    %18 = arith.cmpf one, %17, %17 : vector<1x32xf32>
    %cst_8 = arith.constant 0.000000e+00 : f32
    %19 = vector.broadcast %cst_8 : f32 to vector<1x32xf32>
    %20 = arith.select %18, %19, %17 : vector<1x32xi1>, vector<1x32xf32>
    %cst_9 = arith.constant -3.40282347E+38 : f32
    %cst_10 = arith.constant 3.40282347E+38 : f32
    %21 = vector.broadcast %cst_9 : f32 to vector<1x32xf32>
    %22 = arith.maximumf %21, %20 : vector<1x32xf32>
    %23 = vector.broadcast %cst_10 : f32 to vector<1x32xf32>
    %24 = arith.minimumf %23, %22 : vector<1x32xf32>
    %cst_11 = arith.constant 1.000000e+00 : f32
    %25 = vector.broadcast %cst_11 : f32 to vector<1x32xf32>
    %26 = arith.subf %25, %24 : vector<1x32xf32>
    %cst_12 = arith.constant 1.000000e-01 : f32
    %27 = vector.broadcast %cst_12 : f32 to vector<1x32xf32>
    %28 = arith.mulf %27, %26 : vector<1x32xf32>
    %cst_13 = arith.constant 4.500000e-01 : f32
    %29 = vector.broadcast %cst_13 : f32 to vector<1x32xf32>
    %30 = arith.addf %28, %29 : vector<1x32xf32>
    %c0_14 = arith.constant 0 : index
    %c0_15 = arith.constant 0 : index
    %31 = vector.load %arg3[%c0_14, %c0_15] : memref<1x32xf32, #tpu.memory_space<vmem>>, vector<1x32xf32>
    %32 = arith.cmpf oge, %31, %30 : vector<1x32xf32>
    %33 = arith.extui %32 : vector<1x32xi1> to vector<1x32xi32>
    %34 = arith.sitofp %33 : vector<1x32xi32> to vector<1x32xf32>
    %c0_16 = arith.constant 0 : index
    %c0_17 = arith.constant 0 : index
    %35 = vector.load %arg4[%c0_16, %c0_17] : memref<1x32xf32, #tpu.memory_space<vmem>>, vector<1x32xf32>
    tpu.vector_store %arg4[%c0_16, %c0_17], %34 {strides = array<i32>} : memref<1x32xf32, #tpu.memory_space<vmem>>, vector<1x32xf32>,
    return
  }
  func.func @transform_0(%arg0: i32) -> (i32, i32) {
    %c0_i32 = arith.constant 0 : i32
    %c0_i32_0 = arith.constant 0 : i32
    %c0_i32_1 = arith.constant 0 : i32
    return %c0_i32, %c0_i32_0 : i32, i32
  }
  func.func @transform_1(%arg0: i32) -> (i32, i32) {
    %c0_i32 = arith.constant 0 : i32
    %c0_i32_0 = arith.constant 0 : i32
    return %c0_i32, %arg0 : i32, i32
  }
  func.func @transform_2(%arg0: i32) -> (i32, i32) {
    %c0_i32 = arith.constant 0 : i32
    %c0_i32_0 = arith.constant 0 : i32
    return %c0_i32, %arg0 : i32, i32
  }
  func.func @transform_3(%arg0: i32) -> (i32, i32) {
    %c0_i32 = arith.constant 0 : i32
    %c0_i32_0 = arith.constant 0 : i32
    return %c0_i32, %arg0 : i32, i32
  }
}

module attributes {stable_mosaic.version = 11 : i64} {
  func.func @_apply_kernel(%arg0: i32, %arg1: i32, %arg2: memref<1x1xf32, #tpu.memory_space<smem>>, %arg3: memref<8x32xf32, #tpu.memory_space<vmem>>, %arg4: memref<1x32xf32, #tpu.memory_space<vmem>>, %arg5: memref<8x32xf32, #tpu.memory_space<vmem>>) attributes {dimension_semantics = [#tpu.dimension_semantics<parallel>, #tpu.dimension_semantics<parallel>], iteration_bounds = array<i64: 1, 1>, scalar_prefetch = 0 : i64, scratch_operands = 0 : i64, tpu.core_type = #tpu.core_type<tc>, window_params = [{transform_indices = @transform_0, window_bounds = array<i64: 1, 1>}, {transform_indices = @transform_1, window_bounds = array<i64: 8, 32>}, {transform_indices = @transform_2, window_bounds = array<i64: 1, 32>}, {transform_indices = @transform_3, window_bounds = array<i64: 8, 32>}]} {
    %c0 = arith.constant 0 : index
    %c0_0 = arith.constant 0 : index
    %0 = memref.load %arg2[%c0, %c0_0] : memref<1x1xf32, #tpu.memory_space<smem>>
    %c0_1 = arith.constant 0 : index
    %c0_2 = arith.constant 0 : index
    %1 = vector.load %arg4[%c0_1, %c0_2] : memref<1x32xf32, #tpu.memory_space<vmem>>, vector<1x32xf32>
    %2 = vector.broadcast %0 : f32 to vector<1x32xf32>
    %3 = arith.mulf %1, %2 : vector<1x32xf32>
    %c0_3 = arith.constant 0 : index
    %c0_4 = arith.constant 0 : index
    %4 = vector.load %arg3[%c0_3, %c0_4] : memref<8x32xf32, #tpu.memory_space<vmem>>, vector<8x32xf32>
    %5 = vector.broadcast %3 : vector<1x32xf32> to vector<8x32xf32>
    %6 = arith.mulf %4, %5 : vector<8x32xf32>
    %c0_5 = arith.constant 0 : index
    %c0_6 = arith.constant 0 : index
    %7 = vector.load %arg5[%c0_5, %c0_6] : memref<8x32xf32, #tpu.memory_space<vmem>>, vector<8x32xf32>
    tpu.vector_store %arg5[%c0_5, %c0_6], %6 {strides = array<i32>} : memref<8x32xf32, #tpu.memory_space<vmem>>, vector<8x32xf32>,
    return
  }
  func.func @transform_0(%arg0: i32, %arg1: i32) -> (i32, i32) {
    %c0_i32 = arith.constant 0 : i32
    %c0_i32_0 = arith.constant 0 : i32
    %c0_i32_1 = arith.constant 0 : i32
    return %c0_i32, %c0_i32_0 : i32, i32
  }
  func.func @transform_1(%arg0: i32, %arg1: i32) -> (i32, i32) {
    %c0_i32 = arith.constant 0 : i32
    return %arg0, %arg1 : i32, i32
  }
  func.func @transform_2(%arg0: i32, %arg1: i32) -> (i32, i32) {
    %c0_i32 = arith.constant 0 : i32
    %c0_i32_0 = arith.constant 0 : i32
    return %c0_i32, %arg1 : i32, i32
  }
  func.func @transform_3(%arg0: i32, %arg1: i32) -> (i32, i32) {
    %c0_i32 = arith.constant 0 : i32
    return %arg0, %arg1 : i32, i32
  }
}

</mosaic_0001>

<llo_original>
// kernel: hybrid_dropout.3
$region0: #{hybrid_dropout.3}
  #allocation0 [shape = 'u32[]', space=smem, size = 0x4, offset = 0x4, fixed_abs, tag = 'smem constant byte address 0x4 - core index']
  #allocation1 [shape = 'u32[144,128]{1,0:T(1,128)}', space=vmem, size = 0x12000, scoped, tag = 'internal scratch']
  #allocation2 [shape = 'f32[1,1]{1,0:T(1,128)S(6)}', space=smem, size = 0x200, scoped, tag = 'scoped memory for hybrid_dropout.3']
  %s0 = inlined_call_operand.<no memory space> [shape: f32[1,1], index: 0, kind: input, shape index: {}]
  %s1 = inlined_call_operand.vmem [shape: f32[8,32], index: 1, kind: input, shape index: {}]
  %s2 = inlined_call_operand.vmem [shape: f32[1,32], index: 2, kind: input, shape index: {}]
  %s3 = inlined_call_operand.hbm [shape: f32[8,32], index: 3, kind: output, shape index: {}]
  %s4 = sld [smem:[#allocation0]]
  $region22: #{hybrid_dropout.3} parent=0
    _
  %s6 = ssub.s32 1, %s4
  %s7 = scalar_select 0, %s6, %s4
  %8 = sst [smem:[#allocation2]] %s0
  $region1: #{hybrid_dropout.3} parent=0
    #allocation3 [shape = 'u8[4096]{0}', space=vmem, size = 0x1000, scoped, tag = 'output window, operand 0, single buffered']
    #allocation4 [shape = 's32[1]{0}', space=sflag, size = 0x4, scoped, tag = 'scoped memory for hybrid_dropout.3']
    %9 = vsyncpa [#allocation4], 0
    // Predicated region
    $region2: #{hybrid_dropout.3} parent=1 // pred_check
      _
    $region3: #{hybrid_dropout.3} parent=1 // pred_check_branch
      %11 = sbr.rel (0) target = $region5
    $region4: #{hybrid_dropout.3} parent=1 // pred_region
      _
    $region5: #{hybrid_dropout.3} parent=1 // pred_fallthru
      _
    // Predicated region
    $region6: #{hybrid_dropout.3} parent=1 // pred_check
      _
    $region7: #{hybrid_dropout.3} parent=1 // pred_check_branch
      %13 = sbr.rel (0) target = $region9
    $region8: #{hybrid_dropout.3} parent=1 // pred_region
      _
    $region9: #{hybrid_dropout.3} parent=1 // pred_fallthru
      _
    // Predicated region
    $region10: #{hybrid_dropout.3} parent=1 // pred_check
      _
    $region11: #{hybrid_dropout.3} parent=1 // pred_check_branch
      %15 = sbr.rel (0) target = $region13
    $region12: #{hybrid_dropout.3} parent=1 // pred_region
      _
    $region13: #{hybrid_dropout.3} parent=1 // pred_fallthru
      _
    %s16 = sld [smem:[#allocation2]]
    %v17 = vld [vmem:[%s2] sm:$0x1]
    %v18 = vstv %s16
    %v19 = vmul.f32 %v17, %v18
    %v20 = vld [vmem:[%s1] sm:$0xff]
    %v22 = vlaneseq
    %v23 = vshrl.u32 %v22, 7
    %v24 = vsub.s32 0, %v23
    %v25 = vrot.slane %v19, %v24
    %v27 = vmul.f32 %v20, %v25
    %vm28 = vcmask 261120
    %29 = vst.msk [vmem:[#allocation3] sm:$0xff] %vm28, %v27
    // Predicated region
    $region14: #{hybrid_dropout.3} parent=1 // pred_check
      _
    $region15: #{hybrid_dropout.3} parent=1 // pred_check_branch
      %31 = sbr.rel (0) target = $region17
    $region16: #{hybrid_dropout.3} parent=1 // pred_region
      %s33 = ssub.s32 128, 128
      %34 = vsyncadd [#allocation4], %s33
      %s36 = sshll.u32 [#allocation3], 4
      %s37 = int_to_ptr.vmem [resolvable:$true] %s36
      %39 = dma.vmem_to_hbm [thread:$0]  %s37, 128, %s3, [#allocation4]
    $region17: #{hybrid_dropout.3} parent=1 // pred_fallthru
      _
    // Predicated region
    $region18: #{hybrid_dropout.3} parent=1 // pred_check
      _
    $region19: #{hybrid_dropout.3} parent=1 // pred_check_branch
      %41 = sbr.rel (0) target = $region21
    $region20: #{hybrid_dropout.3} parent=1 // pred_region
      %42 = dma.done [#allocation4], 128
    $region21: #{hybrid_dropout.3} parent=1 // pred_fallthru
      _
    %43 = vsyncpa [#allocation4], 1

// kernel: hybrid_dropout.2
$region0: #{hybrid_dropout.2}
  #allocation0 [shape = 'u32[]', space=smem, size = 0x4, offset = 0x4, fixed_abs, tag = 'smem constant byte address 0x4 - core index']
  #allocation1 [shape = 'u32[144,128]{1,0:T(1,128)}', space=vmem, size = 0x12000, scoped, tag = 'internal scratch']
  %s0 = inlined_call_operand.vmem [shape: f32[2,8], index: 0, kind: input, shape index: {}]
  %s1 = inlined_call_operand.vmem [shape: f32[8,32], index: 1, kind: input, shape index: {}]
  %s2 = inlined_call_operand.vmem [shape: f32[1,32], index: 2, kind: input, shape index: {}]
  %s3 = inlined_call_operand.vmem [shape: f32[1,32], index: 3, kind: output, shape index: {}]
  %s4 = sld [smem:[#allocation0]]
  $region22: #{hybrid_dropout.2} parent=0
    _
  %s6 = ssub.s32 1, %s4
  %s7 = scalar_select 0, %s6, %s4
  // Predicated region
  $region2: #{hybrid_dropout.2} parent=0 // pred_check
    _
  $region3: #{hybrid_dropout.2} parent=0 // pred_check_branch
    %9 = sbr.rel (0) target = $region5
  $region4: #{hybrid_dropout.2} parent=0 // pred_region
    _
  $region5: #{hybrid_dropout.2} parent=0 // pred_fallthru
    _
  // Predicated region
  $region6: #{hybrid_dropout.2} parent=0 // pred_check
    _
  $region7: #{hybrid_dropout.2} parent=0 // pred_check_branch
    %11 = sbr.rel (0) target = $region9
  $region8: #{hybrid_dropout.2} parent=0 // pred_region
    _
  $region9: #{hybrid_dropout.2} parent=0 // pred_fallthru
    _
  // Predicated region
  $region10: #{hybrid_dropout.2} parent=0 // pred_check
    _
  $region11: #{hybrid_dropout.2} parent=0 // pred_check_branch
    %13 = sbr.rel (0) target = $region13
  $region12: #{hybrid_dropout.2} parent=0 // pred_region
    _
  $region13: #{hybrid_dropout.2} parent=0 // pred_fallthru
    _
  %v14 = vld [vmem:[%s1] sm:$0xff]
  %v15 = vld [vmem:[%s0] sm:$0x3]
  %vm16 = vcmask 64512
  %v18 = vsel %vm16, %v15, 0
  %20 = vmatprep.subr.mxu0 0.0
  %v21 = vand.u32 %v14, 4294901760
  %22 = vmatpush1.msra.mxu0 %v21
  %23 = vmatprep.subr.mxu0 0.0
  %24 = vmatpush1.msra.mxu0 0.0
  %25 = vmatprep.subr.mxu0 0.0
  %26 = vmatpush1.msra.mxu0 0.0
  %27 = vmatprep.subr.mxu0 0.0
  %28 = vmatpush1.msra.mxu0 0.0
  %29 = vmatprep.subr.mxu0 0.0
  %30 = vmatpush1.msra.mxu0 0.0
  %31 = vmatprep.subr.mxu0 0.0
  %32 = vmatpush1.msra.mxu0 0.0
  %33 = vmatprep.subr.mxu0 0.0
  %34 = vmatpush1.msra.mxu0 0.0
  %35 = vmatprep.subr.mxu0 0.0
  %36 = vmatpush1.msra.mxu0 0.0
  %37 = vmatprep.subr.mxu0 0.0
  %38 = vmatpush1.msra.mxu0 0.0
  %39 = vmatprep.subr.mxu0 0.0
  %40 = vmatpush1.msra.mxu0 0.0
  %41 = vmatprep.subr.mxu0 0.0
  %42 = vmatpush1.msra.mxu0 0.0
  %43 = vmatprep.subr.mxu0 0.0
  %44 = vmatpush1.msra.mxu0 0.0
  %45 = vmatprep.subr.mxu0 0.0
  %46 = vmatpush1.msra.mxu0 0.0
  %47 = vmatprep.subr.mxu0 0.0
  %48 = vmatpush1.msra.mxu0 0.0
  %49 = vmatprep.subr.mxu0 0.0
  %50 = vmatpush1.msra.mxu0 0.0
  %51 = vmatprep.subr.mxu0 0.0
  %52 = vmatpush1.msra.mxu0 0.0
  %53 = vmatprep.subr.mxu0 0.0
  %54 = vmatpush1.msra.mxu0 0.0
  %55 = vmatprep.subr.mxu0 0.0
  %56 = vmatpush1.msra.mxu0 0.0
  %57 = vmatprep.subr.mxu0 0.0
  %58 = vmatpush1.msra.mxu0 0.0
  %59 = vmatprep.subr.mxu0 0.0
  %60 = vmatpush1.msra.mxu0 0.0
  %61 = vmatprep.subr.mxu0 0.0
  %62 = vmatpush1.msra.mxu0 0.0
  %63 = vmatprep.subr.mxu0 0.0
  %64 = vmatpush1.msra.mxu0 0.0
  %65 = vmatprep.subr.mxu0 0.0
  %66 = vmatpush1.msra.mxu0 0.0
  %67 = vmatprep.subr.mxu0 0.0
  %68 = vmatpush1.msra.mxu0 0.0
  %69 = vmatprep.subr.mxu0 0.0
  %70 = vmatpush1.msra.mxu0 0.0
  %71 = vmatprep.subr.mxu0 0.0
  %72 = vmatpush1.msra.mxu0 0.0
  %73 = vmatprep.subr.mxu0 0.0
  %74 = vmatpush1.msra.mxu0 0.0
  %75 = vmatprep.subr.mxu0 0.0
  %76 = vmatpush1.msra.mxu0 0.0
  %77 = vmatprep.subr.mxu0 0.0
  %78 = vmatpush1.msra.mxu0 0.0
  %79 = vmatprep.subr.mxu0 0.0
  %80 = vmatpush1.msra.mxu0 0.0
  %81 = vmatprep.subr.mxu0 0.0
  %82 = vmatpush1.msra.mxu0 0.0
  %83 = vmatprep.subr.mxu0 0.0
  %84 = vmatpush1.msra.mxu0 0.0
  %85 = vmatprep.mubr.f32.mxu0 0.0
  %v86 = vand.u32 %v18, 4294901760
  %v87 = vsub.f32 %v18, %v86
  %v88 = vand.u32 %v87, 4294901760
  %v89 = vsub.f32 %v87, %v88
  %v90 = vand.u32 %v89, 4294901760
  %91 = vmatmul.mubr.f32.gmra.mrb[0].mxu0 %v90
  %v92 = vpop.f32.mrb[0].mxu0
  %v93 = vadd.f32 0.0, %v92
  %v94 = vpop.f32.mrb[0].mxu0
  %95 = vdwg.mxu0
  %96 = vmatprep.subr.mxu0 0.0
  %v97 = vand.u32 %v14, 4294901760
  %v98 = vsub.f32 %v14, %v97
  %v99 = vand.u32 %v98, 4294901760
  %v100 = vsub.f32 %v98, %v99
  %v101 = vand.u32 %v100, 4294901760
  %102 = vmatpush1.msra.mxu0 %v101
  %103 = vmatprep.subr.mxu0 0.0
  %104 = vmatpush1.msra.mxu0 0.0
  %105 = vmatprep.subr.mxu0 0.0
  %106 = vmatpush1.msra.mxu0 0.0
  %107 = vmatprep.subr.mxu0 0.0
  %108 = vmatpush1.msra.mxu0 0.0
  %109 = vmatprep.subr.mxu0 0.0
  %110 = vmatpush1.msra.mxu0 0.0
  %111 = vmatprep.subr.mxu0 0.0
  %112 = vmatpush1.msra.mxu0 0.0
  %113 = vmatprep.subr.mxu0 0.0
  %114 = vmatpush1.msra.mxu0 0.0
  %115 = vmatprep.subr.mxu0 0.0
  %116 = vmatpush1.msra.mxu0 0.0
  %117 = vmatprep.subr.mxu0 0.0
  %118 = vmatpush1.msra.mxu0 0.0
  %119 = vmatprep.subr.mxu0 0.0
  %120 = vmatpush1.msra.mxu0 0.0
  %121 = vmatprep.subr.mxu0 0.0
  %122 = vmatpush1.msra.mxu0 0.0
  %123 = vmatprep.subr.mxu0 0.0
  %124 = vmatpush1.msra.mxu0 0.0
  %125 = vmatprep.subr.mxu0 0.0
  %126 = vmatpush1.msra.mxu0 0.0
  %127 = vmatprep.subr.mxu0 0.0
  %128 = vmatpush1.msra.mxu0 0.0
  %129 = vmatprep.subr.mxu0 0.0
  %130 = vmatpush1.msra.mxu0 0.0
  %131 = vmatprep.subr.mxu0 0.0
  %132 = vmatpush1.msra.mxu0 0.0
  %133 = vmatprep.subr.mxu0 0.0
  %134 = vmatpush1.msra.mxu0 0.0
  %135 = vmatprep.subr.mxu0 0.0
  %136 = vmatpush1.msra.mxu0 0.0
  %137 = vmatprep.subr.mxu0 0.0
  %138 = vmatpush1.msra.mxu0 0.0
  %139 = vmatprep.subr.mxu0 0.0
  %140 = vmatpush1.msra.mxu0 0.0
  %141 = vmatprep.subr.mxu0 0.0
  %142 = vmatpush1.msra.mxu0 0.0
  %143 = vmatprep.subr.mxu0 0.0
  %144 = vmatpush1.msra.mxu0 0.0
  %145 = vmatprep.subr.mxu0 0.0
  %146 = vmatpush1.msra.mxu0 0.0
  %147 = vmatprep.subr.mxu0 0.0
  %148 = vmatpush1.msra.mxu0 0.0
  %149 = vmatprep.subr.mxu0 0.0
  %150 = vmatpush1.msra.mxu0 0.0
  %151 = vmatprep.subr.mxu0 0.0
  %152 = vmatpush1.msra.mxu0 0.0
  %153 = vmatprep.subr.mxu0 0.0
  %154 = vmatpush1.msra.mxu0 0.0
  %155 = vmatprep.subr.mxu0 0.0
  %156 = vmatpush1.msra.mxu0 0.0
  %157 = vmatprep.subr.mxu0 0.0
  %158 = vmatpush1.msra.mxu0 0.0
  %159 = vmatprep.subr.mxu0 0.0
  %160 = vmatpush1.msra.mxu0 0.0
  %161 = vmatprep.subr.mxu0 0.0
  %162 = vmatpush1.msra.mxu0 0.0
  %163 = vmatprep.subr.mxu0 0.0
  %164 = vmatpush1.msra.mxu0 0.0
  %165 = vmatprep.mubr.f32.mxu0 0.0
  %v166 = vand.u32 %v18, 4294901760
  %167 = vmatmul.mubr.f32.gmra.mrb[0].mxu0 %v166
  %v168 = vpop.f32.mrb[0].mxu0
  %v169 = vadd.f32 %v93, %v168
  %v170 = vpop.f32.mrb[0].mxu0
  %171 = vdwg.mxu0
  %172 = vmatprep.subr.mxu0 0.0
  %v173 = vand.u32 %v14, 4294901760
  %v174 = vsub.f32 %v14, %v173
  %175 = vmatpush1.msra.mxu0 %v174
  %176 = vmatprep.subr.mxu0 0.0
  %177 = vmatpush1.msra.mxu0 0.0
  %178 = vmatprep.subr.mxu0 0.0
  %179 = vmatpush1.msra.mxu0 0.0
  %180 = vmatprep.subr.mxu0 0.0
  %181 = vmatpush1.msra.mxu0 0.0
  %182 = vmatprep.subr.mxu0 0.0
  %183 = vmatpush1.msra.mxu0 0.0
  %184 = vmatprep.subr.mxu0 0.0
  %185 = vmatpush1.msra.mxu0 0.0
  %186 = vmatprep.subr.mxu0 0.0
  %187 = vmatpush1.msra.mxu0 0.0
  %188 = vmatprep.subr.mxu0 0.0
  %189 = vmatpush1.msra.mxu0 0.0
  %190 = vmatprep.subr.mxu0 0.0
  %191 = vmatpush1.msra.mxu0 0.0
  %192 = vmatprep.subr.mxu0 0.0
  %193 = vmatpush1.msra.mxu0 0.0
  %194 = vmatprep.subr.mxu0 0.0
  %195 = vmatpush1.msra.mxu0 0.0
  %196 = vmatprep.subr.mxu0 0.0
  %197 = vmatpush1.msra.mxu0 0.0
  %198 = vmatprep.subr.mxu0 0.0
  %199 = vmatpush1.msra.mxu0 0.0
  %200 = vmatprep.subr.mxu0 0.0
  %201 = vmatpush1.msra.mxu0 0.0
  %202 = vmatprep.subr.mxu0 0.0
  %203 = vmatpush1.msra.mxu0 0.0
  %204 = vmatprep.subr.mxu0 0.0
  %205 = vmatpush1.msra.mxu0 0.0
  %206 = vmatprep.subr.mxu0 0.0
  %207 = vmatpush1.msra.mxu0 0.0
  %208 = vmatprep.subr.mxu0 0.0
  %209 = vmatpush1.msra.mxu0 0.0
  %210 = vmatprep.subr.mxu0 0.0
  %211 = vmatpush1.msra.mxu0 0.0
  %212 = vmatprep.subr.mxu0 0.0
  %213 = vmatpush1.msra.mxu0 0.0
  %214 = vmatprep.subr.mxu0 0.0
  %215 = vmatpush1.msra.mxu0 0.0
  %216 = vmatprep.subr.mxu0 0.0
  %217 = vmatpush1.msra.mxu0 0.0
  %218 = vmatprep.subr.mxu0 0.0
  %219 = vmatpush1.msra.mxu0 0.0
  %220 = vmatprep.subr.mxu0 0.0
  %221 = vmatpush1.msra.mxu0 0.0
  %222 = vmatprep.subr.mxu0 0.0
  %223 = vmatpush1.msra.mxu0 0.0
  %224 = vmatprep.subr.mxu0 0.0
  %225 = vmatpush1.msra.mxu0 0.0
  %226 = vmatprep.subr.mxu0 0.0
  %227 = vmatpush1.msra.mxu0 0.0
  %228 = vmatprep.subr.mxu0 0.0
  %229 = vmatpush1.msra.mxu0 0.0
  %230 = vmatprep.subr.mxu0 0.0
  %231 = vmatpush1.msra.mxu0 0.0
  %232 = vmatprep.subr.mxu0 0.0
  %233 = vmatpush1.msra.mxu0 0.0
  %234 = vmatprep.subr.mxu0 0.0
  %235 = vmatpush1.msra.mxu0 0.0
  %236 = vmatprep.subr.mxu0 0.0
  %237 = vmatpush1.msra.mxu0 0.0
  %238 = vmatprep.mubr.f32.mxu0 0.0
  %v239 = vand.u32 %v18, 4294901760
  %v240 = vsub.f32 %v18, %v239
  %241 = vmatmul.mubr.f32.gmra.mrb[0].mxu0 %v240
  %v242 = vpop.f32.mrb[0].mxu0
  %v243 = vadd.f32 %v169, %v242
  %v244 = vpop.f32.mrb[0].mxu0
  %245 = vdwg.mxu0
  %246 = vmatprep.subr.mxu0 0.0
  %v247 = vand.u32 %v14, 4294901760
  %248 = vmatpush1.msra.mxu0 %v247
  %249 = vmatprep.subr.mxu0 0.0
  %250 = vmatpush1.msra.mxu0 0.0
  %251 = vmatprep.subr.mxu0 0.0
  %252 = vmatpush1.msra.mxu0 0.0
  %253 = vmatprep.subr.mxu0 0.0
  %254 = vmatpush1.msra.mxu0 0.0
  %255 = vmatprep.subr.mxu0 0.0
  %256 = vmatpush1.msra.mxu0 0.0
  %257 = vmatprep.subr.mxu0 0.0
  %258 = vmatpush1.msra.mxu0 0.0
  %259 = vmatprep.subr.mxu0 0.0
  %260 = vmatpush1.msra.mxu0 0.0
  %261 = vmatprep.subr.mxu0 0.0
  %262 = vmatpush1.msra.mxu0 0.0
  %263 = vmatprep.subr.mxu0 0.0
  %264 = vmatpush1.msra.mxu0 0.0
  %265 = vmatprep.subr.mxu0 0.0
  %266 = vmatpush1.msra.mxu0 0.0
  %267 = vmatprep.subr.mxu0 0.0
  %268 = vmatpush1.msra.mxu0 0.0
  %269 = vmatprep.subr.mxu0 0.0
  %270 = vmatpush1.msra.mxu0 0.0
  %271 = vmatprep.subr.mxu0 0.0
  %272 = vmatpush1.msra.mxu0 0.0
  %273 = vmatprep.subr.mxu0 0.0
  %274 = vmatpush1.msra.mxu0 0.0
  %275 = vmatprep.subr.mxu0 0.0
  %276 = vmatpush1.msra.mxu0 0.0
  %277 = vmatprep.subr.mxu0 0.0
  %278 = vmatpush1.msra.mxu0 0.0
  %279 = vmatprep.subr.mxu0 0.0
  %280 = vmatpush1.msra.mxu0 0.0
  %281 = vmatprep.subr.mxu0 0.0
  %282 = vmatpush1.msra.mxu0 0.0
  %283 = vmatprep.subr.mxu0 0.0
  %284 = vmatpush1.msra.mxu0 0.0
  %285 = vmatprep.subr.mxu0 0.0
  %286 = vmatpush1.msra.mxu0 0.0
  %287 = vmatprep.subr.mxu0 0.0
  %288 = vmatpush1.msra.mxu0 0.0
  %289 = vmatprep.subr.mxu0 0.0
  %290 = vmatpush1.msra.mxu0 0.0
  %291 = vmatprep.subr.mxu0 0.0
  %292 = vmatpush1.msra.mxu0 0.0
  %293 = vmatprep.subr.mxu0 0.0
  %294 = vmatpush1.msra.mxu0 0.0
  %295 = vmatprep.subr.mxu0 0.0
  %296 = vmatpush1.msra.mxu0 0.0
  %297 = vmatprep.subr.mxu0 0.0
  %298 = vmatpush1.msra.mxu0 0.0
  %299 = vmatprep.subr.mxu0 0.0
  %300 = vmatpush1.msra.mxu0 0.0
  %301 = vmatprep.subr.mxu0 0.0
  %302 = vmatpush1.msra.mxu0 0.0
  %303 = vmatprep.subr.mxu0 0.0
  %304 = vmatpush1.msra.mxu0 0.0
  %305 = vmatprep.subr.mxu0 0.0
  %306 = vmatpush1.msra.mxu0 0.0
  %307 = vmatprep.subr.mxu0 0.0
  %308 = vmatpush1.msra.mxu0 0.0
  %309 = vmatprep.subr.mxu0 0.0
  %310 = vmatpush1.msra.mxu0 0.0
  %311 = vmatprep.mubr.f32.mxu0 0.0
  %v312 = vand.u32 %v18, 4294901760
  %v313 = vsub.f32 %v18, %v312
  %v314 = vand.u32 %v313, 4294901760
  %315 = vmatmul.mubr.f32.gmra.mrb[0].mxu0 %v314
  %v316 = vpop.f32.mrb[0].mxu0
  %v317 = vadd.f32 %v243, %v316
  %v318 = vpop.f32.mrb[0].mxu0
  %319 = vdwg.mxu0
  %320 = vmatprep.subr.mxu0 0.0
  %v321 = vand.u32 %v14, 4294901760
  %v322 = vsub.f32 %v14, %v321
  %v323 = vand.u32 %v322, 4294901760
  %324 = vmatpush1.msra.mxu0 %v323
  %325 = vmatprep.subr.mxu0 0.0
  %326 = vmatpush1.msra.mxu0 0.0
  %327 = vmatprep.subr.mxu0 0.0
  %328 = vmatpush1.msra.mxu0 0.0
  %329 = vmatprep.subr.mxu0 0.0
  %330 = vmatpush1.msra.mxu0 0.0
  %331 = vmatprep.subr.mxu0 0.0
  %332 = vmatpush1.msra.mxu0 0.0
  %333 = vmatprep.subr.mxu0 0.0
  %334 = vmatpush1.msra.mxu0 0.0
  %335 = vmatprep.subr.mxu0 0.0
  %336 = vmatpush1.msra.mxu0 0.0
  %337 = vmatprep.subr.mxu0 0.0
  %338 = vmatpush1.msra.mxu0 0.0
  %339 = vmatprep.subr.mxu0 0.0
  %340 = vmatpush1.msra.mxu0 0.0
  %341 = vmatprep.subr.mxu0 0.0
  %342 = vmatpush1.msra.mxu0 0.0
  %343 = vmatprep.subr.mxu0 0.0
  %344 = vmatpush1.msra.mxu0 0.0
  %345 = vmatprep.subr.mxu0 0.0
  %346 = vmatpush1.msra.mxu0 0.0
  %347 = vmatprep.subr.mxu0 0.0
  %348 = vmatpush1.msra.mxu0 0.0
  %349 = vmatprep.subr.mxu0 0.0
  %350 = vmatpush1.msra.mxu0 0.0
  %351 = vmatprep.subr.mxu0 0.0
  %352 = vmatpush1.msra.mxu0 0.0
  %353 = vmatprep.subr.mxu0 0.0
  %354 = vmatpush1.msra.mxu0 0.0
  %355 = vmatprep.subr.mxu0 0.0
  %356 = vmatpush1.msra.mxu0 0.0
  %357 = vmatprep.subr.mxu0 0.0
  %358 = vmatpush1.msra.mxu0 0.0
  %359 = vmatprep.subr.mxu0 0.0
  %360 = vmatpush1.msra.mxu0 0.0
  %361 = vmatprep.subr.mxu0 0.0
  %362 = vmatpush1.msra.mxu0 0.0
  %363 = vmatprep.subr.mxu0 0.0
  %364 = vmatpush1.msra.mxu0 0.0
  %365 = vmatprep.subr.mxu0 0.0
  %366 = vmatpush1.msra.mxu0 0.0
  %367 = vmatprep.subr.mxu0 0.0
  %368 = vmatpush1.msra.mxu0 0.0
  %369 = vmatprep.subr.mxu0 0.0
  %370 = vmatpush1.msra.mxu0 0.0
  %371 = vmatprep.subr.mxu0 0.0
  %372 = vmatpush1.msra.mxu0 0.0
  %373 = vmatprep.subr.mxu0 0.0
  %374 = vmatpush1.msra.mxu0 0.0
  %375 = vmatprep.subr.mxu0 0.0
  %376 = vmatpush1.msra.mxu0 0.0
  %377 = vmatprep.subr.mxu0 0.0
  %378 = vmatpush1.msra.mxu0 0.0
  %379 = vmatprep.subr.mxu0 0.0
  %380 = vmatpush1.msra.mxu0 0.0
  %381 = vmatprep.subr.mxu0 0.0
  %382 = vmatpush1.msra.mxu0 0.0
  %383 = vmatprep.subr.mxu0 0.0
  %384 = vmatpush1.msra.mxu0 0.0
  %385 = vmatprep.subr.mxu0 0.0
  %386 = vmatpush1.msra.mxu0 0.0
  %387 = vmatprep.mubr.f32.mxu0 0.0
  %v388 = vand.u32 %v18, 4294901760
  %389 = vmatmul.mubr.f32.gmra.mrb[0].mxu0 %v388
  %v390 = vpop.f32.mrb[0].mxu0
  %v391 = vadd.f32 %v317, %v390
  %v392 = vpop.f32.mrb[0].mxu0
  %393 = vdwg.mxu0
  %394 = vmatprep.subr.mxu0 0.0
  %v395 = vand.u32 %v14, 4294901760
  %396 = vmatpush1.msra.mxu0 %v395
  %397 = vmatprep.subr.mxu0 0.0
  %398 = vmatpush1.msra.mxu0 0.0
  %399 = vmatprep.subr.mxu0 0.0
  %400 = vmatpush1.msra.mxu0 0.0
  %401 = vmatprep.subr.mxu0 0.0
  %402 = vmatpush1.msra.mxu0 0.0
  %403 = vmatprep.subr.mxu0 0.0
  %404 = vmatpush1.msra.mxu0 0.0
  %405 = vmatprep.subr.mxu0 0.0
  %406 = vmatpush1.msra.mxu0 0.0
  %407 = vmatprep.subr.mxu0 0.0
  %408 = vmatpush1.msra.mxu0 0.0
  %409 = vmatprep.subr.mxu0 0.0
  %410 = vmatpush1.msra.mxu0 0.0
  %411 = vmatprep.subr.mxu0 0.0
  %412 = vmatpush1.msra.mxu0 0.0
  %413 = vmatprep.subr.mxu0 0.0
  %414 = vmatpush1.msra.mxu0 0.0
  %415 = vmatprep.subr.mxu0 0.0
  %416 = vmatpush1.msra.mxu0 0.0
  %417 = vmatprep.subr.mxu0 0.0
  %418 = vmatpush1.msra.mxu0 0.0
  %419 = vmatprep.subr.mxu0 0.0
  %420 = vmatpush1.msra.mxu0 0.0
  %421 = vmatprep.subr.mxu0 0.0
  %422 = vmatpush1.msra.mxu0 0.0
  %423 = vmatprep.subr.mxu0 0.0
  %424 = vmatpush1.msra.mxu0 0.0
  %425 = vmatprep.subr.mxu0 0.0
  %426 = vmatpush1.msra.mxu0 0.0
  %427 = vmatprep.subr.mxu0 0.0
  %428 = vmatpush1.msra.mxu0 0.0
  %429 = vmatprep.subr.mxu0 0.0
  %430 = vmatpush1.msra.mxu0 0.0
  %431 = vmatprep.subr.mxu0 0.0
  %432 = vmatpush1.msra.mxu0 0.0
  %433 = vmatprep.subr.mxu0 0.0
  %434 = vmatpush1.msra.mxu0 0.0
  %435 = vmatprep.subr.mxu0 0.0
  %436 = vmatpush1.msra.mxu0 0.0
  %437 = vmatprep.subr.mxu0 0.0
  %438 = vmatpush1.msra.mxu0 0.0
  %439 = vmatprep.subr.mxu0 0.0
  %440 = vmatpush1.msra.mxu0 0.0
  %441 = vmatprep.subr.mxu0 0.0
  %442 = vmatpush1.msra.mxu0 0.0
  %443 = vmatprep.subr.mxu0 0.0
  %444 = vmatpush1.msra.mxu0 0.0
  %445 = vmatprep.subr.mxu0 0.0
  %446 = vmatpush1.msra.mxu0 0.0
  %447 = vmatprep.subr.mxu0 0.0
  %448 = vmatpush1.msra.mxu0 0.0
  %449 = vmatprep.subr.mxu0 0.0
  %450 = vmatpush1.msra.mxu0 0.0
  %451 = vmatprep.subr.mxu0 0.0
  %452 = vmatpush1.msra.mxu0 0.0
  %453 = vmatprep.subr.mxu0 0.0
  %454 = vmatpush1.msra.mxu0 0.0
  %455 = vmatprep.subr.mxu0 0.0
  %456 = vmatpush1.msra.mxu0 0.0
  %457 = vmatprep.subr.mxu0 0.0
  %458 = vmatpush1.msra.mxu0 0.0
  %459 = vmatprep.mubr.f32.mxu0 0.0
  %v460 = vand.u32 %v18, 4294901760
  %461 = vmatmul.mubr.f32.gmra.mrb[0].mxu0 %v460
  %v462 = vpop.f32.mrb[0].mxu0
  %v463 = vadd.f32 %v391, %v462
  %v464 = vpop.f32.mrb[0].mxu0
  %465 = vdwg.mxu0
  %v466 = vmul.f32 %v463, 0.125
  %v467 = vlaneseq
  %v468 = vshrl.u32 %v467, 7
  %v469 = vsub.s32 0, %v468
  %v470 = vrot.slane %v466, %v469
  %v471 = vsub.f32 %v14, %v470
  %v472 = vrot.slane %v15, 1
  %v473 = vsel %vm16, %v472, 0
  %475 = vmatprep.subr.mxu0 0.0
  %v476 = vand.u32 %v471, 4294901760
  %477 = vmatpush1.msra.mxu0 %v476
  %478 = vmatprep.subr.mxu0 0.0
  %479 = vmatpush1.msra.mxu0 0.0
  %480 = vmatprep.subr.mxu0 0.0
  %481 = vmatpush1.msra.mxu0 0.0
  %482 = vmatprep.subr.mxu0 0.0
  %483 = vmatpush1.msra.mxu0 0.0
  %484 = vmatprep.subr.mxu0 0.0
  %485 = vmatpush1.msra.mxu0 0.0
  %486 = vmatprep.subr.mxu0 0.0
  %487 = vmatpush1.msra.mxu0 0.0
  %488 = vmatprep.subr.mxu0 0.0
  %489 = vmatpush1.msra.mxu0 0.0
  %490 = vmatprep.subr.mxu0 0.0
  %491 = vmatpush1.msra.mxu0 0.0
  %492 = vmatprep.subr.mxu0 0.0
  %493 = vmatpush1.msra.mxu0 0.0
  %494 = vmatprep.subr.mxu0 0.0
  %495 = vmatpush1.msra.mxu0 0.0
  %496 = vmatprep.subr.mxu0 0.0
  %497 = vmatpush1.msra.mxu0 0.0
  %498 = vmatprep.subr.mxu0 0.0
  %499 = vmatpush1.msra.mxu0 0.0
  %500 = vmatprep.subr.mxu0 0.0
  %501 = vmatpush1.msra.mxu0 0.0
  %502 = vmatprep.subr.mxu0 0.0
  %503 = vmatpush1.msra.mxu0 0.0
  %504 = vmatprep.subr.mxu0 0.0
  %505 = vmatpush1.msra.mxu0 0.0
  %506 = vmatprep.subr.mxu0 0.0
  %507 = vmatpush1.msra.mxu0 0.0
  %508 = vmatprep.subr.mxu0 0.0
  %509 = vmatpush1.msra.mxu0 0.0
  %510 = vmatprep.subr.mxu0 0.0
  %511 = vmatpush1.msra.mxu0 0.0
  %512 = vmatprep.subr.mxu0 0.0
  %513 = vmatpush1.msra.mxu0 0.0
  %514 = vmatprep.subr.mxu0 0.0
  %515 = vmatpush1.msra.mxu0 0.0
  %516 = vmatprep.subr.mxu0 0.0
  %517 = vmatpush1.msra.mxu0 0.0
  %518 = vmatprep.subr.mxu0 0.0
  %519 = vmatpush1.msra.mxu0 0.0
  %520 = vmatprep.subr.mxu0 0.0
  %521 = vmatpush1.msra.mxu0 0.0
  %522 = vmatprep.subr.mxu0 0.0
  %523 = vmatpush1.msra.mxu0 0.0
  %524 = vmatprep.subr.mxu0 0.0
  %525 = vmatpush1.msra.mxu0 0.0
  %526 = vmatprep.subr.mxu0 0.0
  %527 = vmatpush1.msra.mxu0 0.0
  %528 = vmatprep.subr.mxu0 0.0
  %529 = vmatpush1.msra.mxu0 0.0
  %530 = vmatprep.subr.mxu0 0.0
  %531 = vmatpush1.msra.mxu0 0.0
  %532 = vmatprep.subr.mxu0 0.0
  %533 = vmatpush1.msra.mxu0 0.0
  %534 = vmatprep.subr.mxu0 0.0
  %535 = vmatpush1.msra.mxu0 0.0
  %536 = vmatprep.subr.mxu0 0.0
  %537 = vmatpush1.msra.mxu0 0.0
  %538 = vmatprep.subr.mxu0 0.0
  %539 = vmatpush1.msra.mxu0 0.0
  %540 = vmatprep.mubr.f32.mxu0 0.0
  %v541 = vand.u32 %v473, 4294901760
  %v542 = vsub.f32 %v473, %v541
  %v543 = vand.u32 %v542, 4294901760
  %v544 = vsub.f32 %v542, %v543
  %v545 = vand.u32 %v544, 4294901760
  %546 = vmatmul.mubr.f32.gmra.mrb[0].mxu0 %v545
  %v547 = vpop.f32.mrb[0].mxu0
  %v548 = vadd.f32 0.0, %v547
  %v549 = vpop.f32.mrb[0].mxu0
  %550 = vdwg.mxu0
  %551 = vmatprep.subr.mxu0 0.0
  %v552 = vand.u32 %v471, 4294901760
  %v553 = vsub.f32 %v471, %v552
  %v554 = vand.u32 %v553, 4294901760
  %v555 = vsub.f32 %v553, %v554
  %v556 = vand.u32 %v555, 4294901760
  %557 = vmatpush1.msra.mxu0 %v556
  %558 = vmatprep.subr.mxu0 0.0
  %559 = vmatpush1.msra.mxu0 0.0
  %560 = vmatprep.subr.mxu0 0.0
  %561 = vmatpush1.msra.mxu0 0.0
  %562 = vmatprep.subr.mxu0 0.0
  %563 = vmatpush1.msra.mxu0 0.0
  %564 = vmatprep.subr.mxu0 0.0
  %565 = vmatpush1.msra.mxu0 0.0
  %566 = vmatprep.subr.mxu0 0.0
  %567 = vmatpush1.msra.mxu0 0.0
  %568 = vmatprep.subr.mxu0 0.0
  %569 = vmatpush1.msra.mxu0 0.0
  %570 = vmatprep.subr.mxu0 0.0
  %571 = vmatpush1.msra.mxu0 0.0
  %572 = vmatprep.subr.mxu0 0.0
  %573 = vmatpush1.msra.mxu0 0.0
  %574 = vmatprep.subr.mxu0 0.0
  %575 = vmatpush1.msra.mxu0 0.0
  %576 = vmatprep.subr.mxu0 0.0
  %577 = vmatpush1.msra.mxu0 0.0
  %578 = vmatprep.subr.mxu0 0.0
  %579 = vmatpush1.msra.mxu0 0.0
  %580 = vmatprep.subr.mxu0 0.0
  %581 = vmatpush1.msra.mxu0 0.0
  %582 = vmatprep.subr.mxu0 0.0
  %583 = vmatpush1.msra.mxu0 0.0
  %584 = vmatprep.subr.mxu0 0.0
  %585 = vmatpush1.msra.mxu0 0.0
  %586 = vmatprep.subr.mxu0 0.0
  %587 = vmatpush1.msra.mxu0 0.0
  %588 = vmatprep.subr.mxu0 0.0
  %589 = vmatpush1.msra.mxu0 0.0
  %590 = vmatprep.subr.mxu0 0.0
  %591 = vmatpush1.msra.mxu0 0.0
  %592 = vmatprep.subr.mxu0 0.0
  %593 = vmatpush1.msra.mxu0 0.0
  %594 = vmatprep.subr.mxu0 0.0
  %595 = vmatpush1.msra.mxu0 0.0
  %596 = vmatprep.subr.mxu0 0.0
  %597 = vmatpush1.msra.mxu0 0.0
  %598 = vmatprep.subr.mxu0 0.0
  %599 = vmatpush1.msra.mxu0 0.0
  %600 = vmatprep.subr.mxu0 0.0
  %601 = vmatpush1.msra.mxu0 0.0
  %602 = vmatprep.subr.mxu0 0.0
  %603 = vmatpush1.msra.mxu0 0.0
  %604 = vmatprep.subr.mxu0 0.0
  %605 = vmatpush1.msra.mxu0 0.0
  %606 = vmatprep.subr.mxu0 0.0
  %607 = vmatpush1.msra.mxu0 0.0
  %608 = vmatprep.subr.mxu0 0.0
  %609 = vmatpush1.msra.mxu0 0.0
  %610 = vmatprep.subr.mxu0 0.0
  %611 = vmatpush1.msra.mxu0 0.0
  %612 = vmatprep.subr.mxu0 0.0
  %613 = vmatpush1.msra.mxu0 0.0
  %614 = vmatprep.subr.mxu0 0.0
  %615 = vmatpush1.msra.mxu0 0.0
  %616 = vmatprep.subr.mxu0 0.0
  %617 = vmatpush1.msra.mxu0 0.0
  %618 = vmatprep.subr.mxu0 0.0
  %619 = vmatpush1.msra.mxu0 0.0
  %620 = vmatprep.mubr.f32.mxu0 0.0
  %v621 = vand.u32 %v473, 4294901760
  %622 = vmatmul.mubr.f32.gmra.mrb[0].mxu0 %v621
  %v623 = vpop.f32.mrb[0].mxu0
  %v624 = vadd.f32 %v548, %v623
  %v625 = vpop.f32.mrb[0].mxu0
  %626 = vdwg.mxu0
  %627 = vmatprep.subr.mxu0 0.0
  %v628 = vand.u32 %v471, 4294901760
  %v629 = vsub.f32 %v471, %v628
  %630 = vmatpush1.msra.mxu0 %v629
  %631 = vmatprep.subr.mxu0 0.0
  %632 = vmatpush1.msra.mxu0 0.0
  %633 = vmatprep.subr.mxu0 0.0
  %634 = vmatpush1.msra.mxu0 0.0
  %635 = vmatprep.subr.mxu0 0.0
  %636 = vmatpush1.msra.mxu0 0.0
  %637 = vmatprep.subr.mxu0 0.0
  %638 = vmatpush1.msra.mxu0 0.0
  %639 = vmatprep.subr.mxu0 0.0
  %640 = vmatpush1.msra.mxu0 0.0
  %641 = vmatprep.subr.mxu0 0.0
  %642 = vmatpush1.msra.mxu0 0.0
  %643 = vmatprep.subr.mxu0 0.0
  %644 = vmatpush1.msra.mxu0 0.0
  %645 = vmatprep.subr.mxu0 0.0
  %646 = vmatpush1.msra.mxu0 0.0
  %647 = vmatprep.subr.mxu0 0.0
  %648 = vmatpush1.msra.mxu0 0.0
  %649 = vmatprep.subr.mxu0 0.0
  %650 = vmatpush1.msra.mxu0 0.0
  %651 = vmatprep.subr.mxu0 0.0
  %652 = vmatpush1.msra.mxu0 0.0
  %653 = vmatprep.subr.mxu0 0.0
  %654 = vmatpush1.msra.mxu0 0.0
  %655 = vmatprep.subr.mxu0 0.0
  %656 = vmatpush1.msra.mxu0 0.0
  %657 = vmatprep.subr.mxu0 0.0
  %658 = vmatpush1.msra.mxu0 0.0
  %659 = vmatprep.subr.mxu0 0.0
  %660 = vmatpush1.msra.mxu0 0.0
  %661 = vmatprep.subr.mxu0 0.0
  %662 = vmatpush1.msra.mxu0 0.0
  %663 = vmatprep.subr.mxu0 0.0
  %664 = vmatpush1.msra.mxu0 0.0
  %665 = vmatprep.subr.mxu0 0.0
  %666 = vmatpush1.msra.mxu0 0.0
  %667 = vmatprep.subr.mxu0 0.0
  %668 = vmatpush1.msra.mxu0 0.0
  %669 = vmatprep.subr.mxu0 0.0
  %670 = vmatpush1.msra.mxu0 0.0
  %671 = vmatprep.subr.mxu0 0.0
  %672 = vmatpush1.msra.mxu0 0.0
  %673 = vmatprep.subr.mxu0 0.0
  %674 = vmatpush1.msra.mxu0 0.0
  %675 = vmatprep.subr.mxu0 0.0
  %676 = vmatpush1.msra.mxu0 0.0
  %677 = vmatprep.subr.mxu0 0.0
  %678 = vmatpush1.msra.mxu0 0.0
  %679 = vmatprep.subr.mxu0 0.0
  %680 = vmatpush1.msra.mxu0 0.0
  %681 = vmatprep.subr.mxu0 0.0
  %682 = vmatpush1.msra.mxu0 0.0
  %683 = vmatprep.subr.mxu0 0.0
  %684 = vmatpush1.msra.mxu0 0.0
  %685 = vmatprep.subr.mxu0 0.0
  %686 = vmatpush1.msra.mxu0 0.0
  %687 = vmatprep.subr.mxu0 0.0
  %688 = vmatpush1.msra.mxu0 0.0
  %689 = vmatprep.subr.mxu0 0.0
  %690 = vmatpush1.msra.mxu0 0.0
  %691 = vmatprep.subr.mxu0 0.0
  %692 = vmatpush1.msra.mxu0 0.0
  %693 = vmatprep.mubr.f32.mxu0 0.0
  %v694 = vand.u32 %v473, 4294901760
  %v695 = vsub.f32 %v473, %v694
  %696 = vmatmul.mubr.f32.gmra.mrb[0].mxu0 %v695
  %v697 = vpop.f32.mrb[0].mxu0
  %v698 = vadd.f32 %v624, %v697
  %v699 = vpop.f32.mrb[0].mxu0
  %700 = vdwg.mxu0
  %701 = vmatprep.subr.mxu0 0.0
  %v702 = vand.u32 %v471, 4294901760
  %703 = vmatpush1.msra.mxu0 %v702
  %704 = vmatprep.subr.mxu0 0.0
  %705 = vmatpush1.msra.mxu0 0.0
  %706 = vmatprep.subr.mxu0 0.0
  %707 = vmatpush1.msra.mxu0 0.0
  %708 = vmatprep.subr.mxu0 0.0
  %709 = vmatpush1.msra.mxu0 0.0
  %710 = vmatprep.subr.mxu0 0.0
  %711 = vmatpush1.msra.mxu0 0.0
  %712 = vmatprep.subr.mxu0 0.0
  %713 = vmatpush1.msra.mxu0 0.0
  %714 = vmatprep.subr.mxu0 0.0
  %715 = vmatpush1.msra.mxu0 0.0
  %716 = vmatprep.subr.mxu0 0.0
  %717 = vmatpush1.msra.mxu0 0.0
  %718 = vmatprep.subr.mxu0 0.0
  %719 = vmatpush1.msra.mxu0 0.0
  %720 = vmatprep.subr.mxu0 0.0
  %721 = vmatpush1.msra.mxu0 0.0
  %722 = vmatprep.subr.mxu0 0.0
  %723 = vmatpush1.msra.mxu0 0.0
  %724 = vmatprep.subr.mxu0 0.0
  %725 = vmatpush1.msra.mxu0 0.0
  %726 = vmatprep.subr.mxu0 0.0
  %727 = vmatpush1.msra.mxu0 0.0
  %728 = vmatprep.subr.mxu0 0.0
  %729 = vmatpush1.msra.mxu0 0.0
  %730 = vmatprep.subr.mxu0 0.0
  %731 = vmatpush1.msra.mxu0 0.0
  %732 = vmatprep.subr.mxu0 0.0
  %733 = vmatpush1.msra.mxu0 0.0
  %734 = vmatprep.subr.mxu0 0.0
  %735 = vmatpush1.msra.mxu0 0.0
  %736 = vmatprep.subr.mxu0 0.0
  %737 = vmatpush1.msra.mxu0 0.0
  %738 = vmatprep.subr.mxu0 0.0
  %739 = vmatpush1.msra.mxu0 0.0
  %740 = vmatprep.subr.mxu0 0.0
  %741 = vmatpush1.msra.mxu0 0.0
  %742 = vmatprep.subr.mxu0 0.0
  %743 = vmatpush1.msra.mxu0 0.0
  %744 = vmatprep.subr.mxu0 0.0
  %745 = vmatpush1.msra.mxu0 0.0
  %746 = vmatprep.subr.mxu0 0.0
  %747 = vmatpush1.msra.mxu0 0.0
  %748 = vmatprep.subr.mxu0 0.0
  %749 = vmatpush1.msra.mxu0 0.0
  %750 = vmatprep.subr.mxu0 0.0
  %751 = vmatpush1.msra.mxu0 0.0
  %752 = vmatprep.subr.mxu0 0.0
  %753 = vmatpush1.msra.mxu0 0.0
  %754 = vmatprep.subr.mxu0 0.0
  %755 = vmatpush1.msra.mxu0 0.0
  %756 = vmatprep.subr.mxu0 0.0
  %757 = vmatpush1.msra.mxu0 0.0
  %758 = vmatprep.subr.mxu0 0.0
  %759 = vmatpush1.msra.mxu0 0.0
  %760 = vmatprep.subr.mxu0 0.0
  %761 = vmatpush1.msra.mxu0 0.0
  %762 = vmatprep.subr.mxu0 0.0
  %763 = vmatpush1.msra.mxu0 0.0
  %764 = vmatprep.subr.mxu0 0.0
  %765 = vmatpush1.msra.mxu0 0.0
  %766 = vmatprep.mubr.f32.mxu0 0.0
  %v767 = vand.u32 %v473, 4294901760
  %v768 = vsub.f32 %v473, %v767
  %v769 = vand.u32 %v768, 4294901760
  %770 = vmatmul.mubr.f32.gmra.mrb[0].mxu0 %v769
  %v771 = vpop.f32.mrb[0].mxu0
  %v772 = vadd.f32 %v698, %v771
  %v773 = vpop.f32.mrb[0].mxu0
  %774 = vdwg.mxu0
  %775 = vmatprep.subr.mxu0 0.0
  %v776 = vand.u32 %v471, 4294901760
  %v777 = vsub.f32 %v471, %v776
  %v778 = vand.u32 %v777, 4294901760
  %779 = vmatpush1.msra.mxu0 %v778
  %780 = vmatprep.subr.mxu0 0.0
  %781 = vmatpush1.msra.mxu0 0.0
  %782 = vmatprep.subr.mxu0 0.0
  %783 = vmatpush1.msra.mxu0 0.0
  %784 = vmatprep.subr.mxu0 0.0
  %785 = vmatpush1.msra.mxu0 0.0
  %786 = vmatprep.subr.mxu0 0.0
  %787 = vmatpush1.msra.mxu0 0.0
  %788 = vmatprep.subr.mxu0 0.0
  %789 = vmatpush1.msra.mxu0 0.0
  %790 = vmatprep.subr.mxu0 0.0
  %791 = vmatpush1.msra.mxu0 0.0
  %792 = vmatprep.subr.mxu0 0.0
  %793 = vmatpush1.msra.mxu0 0.0
  %794 = vmatprep.subr.mxu0 0.0
  %795 = vmatpush1.msra.mxu0 0.0
  %796 = vmatprep.subr.mxu0 0.0
  %797 = vmatpush1.msra.mxu0 0.0
  %798 = vmatprep.subr.mxu0 0.0
  %799 = vmatpush1.msra.mxu0 0.0
  %800 = vmatprep.subr.mxu0 0.0
  %801 = vmatpush1.msra.mxu0 0.0
  %802 = vmatprep.subr.mxu0 0.0
  %803 = vmatpush1.msra.mxu0 0.0
  %804 = vmatprep.subr.mxu0 0.0
  %805 = vmatpush1.msra.mxu0 0.0
  %806 = vmatprep.subr.mxu0 0.0
  %807 = vmatpush1.msra.mxu0 0.0
  %808 = vmatprep.subr.mxu0 0.0
  %809 = vmatpush1.msra.mxu0 0.0
  %810 = vmatprep.subr.mxu0 0.0
  %811 = vmatpush1.msra.mxu0 0.0
  %812 = vmatprep.subr.mxu0 0.0
  %813 = vmatpush1.msra.mxu0 0.0
  %814 = vmatprep.subr.mxu0 0.0
  %815 = vmatpush1.msra.mxu0 0.0
  %816 = vmatprep.subr.mxu0 0.0
  %817 = vmatpush1.msra.mxu0 0.0
  %818 = vmatprep.subr.mxu0 0.0
  %819 = vmatpush1.msra.mxu0 0.0
  %820 = vmatprep.subr.mxu0 0.0
  %821 = vmatpush1.msra.mxu0 0.0
  %822 = vmatprep.subr.mxu0 0.0
  %823 = vmatpush1.msra.mxu0 0.0
  %824 = vmatprep.subr.mxu0 0.0
  %825 = vmatpush1.msra.mxu0 0.0
  %826 = vmatprep.subr.mxu0 0.0
  %827 = vmatpush1.msra.mxu0 0.0
  %828 = vmatprep.subr.mxu0 0.0
  %829 = vmatpush1.msra.mxu0 0.0
  %830 = vmatprep.subr.mxu0 0.0
  %831 = vmatpush1.msra.mxu0 0.0
  %832 = vmatprep.subr.mxu0 0.0
  %833 = vmatpush1.msra.mxu0 0.0
  %834 = vmatprep.subr.mxu0 0.0
  %835 = vmatpush1.msra.mxu0 0.0
  %836 = vmatprep.subr.mxu0 0.0
  %837 = vmatpush1.msra.mxu0 0.0
  %838 = vmatprep.subr.mxu0 0.0
  %839 = vmatpush1.msra.mxu0 0.0
  %840 = vmatprep.subr.mxu0 0.0
  %841 = vmatpush1.msra.mxu0 0.0
  %842 = vmatprep.mubr.f32.mxu0 0.0
  %v843 = vand.u32 %v473, 4294901760
  %844 = vmatmul.mubr.f32.gmra.mrb[0].mxu0 %v843
  %v845 = vpop.f32.mrb[0].mxu0
  %v846 = vadd.f32 %v772, %v845
  %v847 = vpop.f32.mrb[0].mxu0
  %848 = vdwg.mxu0
  %849 = vmatprep.subr.mxu0 0.0
  %v850 = vand.u32 %v471, 4294901760
  %851 = vmatpush1.msra.mxu0 %v850
  %852 = vmatprep.subr.mxu0 0.0
  %853 = vmatpush1.msra.mxu0 0.0
  %854 = vmatprep.subr.mxu0 0.0
  %855 = vmatpush1.msra.mxu0 0.0
  %856 = vmatprep.subr.mxu0 0.0
  %857 = vmatpush1.msra.mxu0 0.0
  %858 = vmatprep.subr.mxu0 0.0
  %859 = vmatpush1.msra.mxu0 0.0
  %860 = vmatprep.subr.mxu0 0.0
  %861 = vmatpush1.msra.mxu0 0.0
  %862 = vmatprep.subr.mxu0 0.0
  %863 = vmatpush1.msra.mxu0 0.0
  %864 = vmatprep.subr.mxu0 0.0
  %865 = vmatpush1.msra.mxu0 0.0
  %866 = vmatprep.subr.mxu0 0.0
  %867 = vmatpush1.msra.mxu0 0.0
  %868 = vmatprep.subr.mxu0 0.0
  %869 = vmatpush1.msra.mxu0 0.0
  %870 = vmatprep.subr.mxu0 0.0
  %871 = vmatpush1.msra.mxu0 0.0
  %872 = vmatprep.subr.mxu0 0.0
  %873 = vmatpush1.msra.mxu0 0.0
  %874 = vmatprep.subr.mxu0 0.0
  %875 = vmatpush1.msra.mxu0 0.0
  %876 = vmatprep.subr.mxu0 0.0
  %877 = vmatpush1.msra.mxu0 0.0
  %878 = vmatprep.subr.mxu0 0.0
  %879 = vmatpush1.msra.mxu0 0.0
  %880 = vmatprep.subr.mxu0 0.0
  %881 = vmatpush1.msra.mxu0 0.0
  %882 = vmatprep.subr.mxu0 0.0
  %883 = vmatpush1.msra.mxu0 0.0
  %884 = vmatprep.subr.mxu0 0.0
  %885 = vmatpush1.msra.mxu0 0.0
  %886 = vmatprep.subr.mxu0 0.0
  %887 = vmatpush1.msra.mxu0 0.0
  %888 = vmatprep.subr.mxu0 0.0
  %889 = vmatpush1.msra.mxu0 0.0
  %890 = vmatprep.subr.mxu0 0.0
  %891 = vmatpush1.msra.mxu0 0.0
  %892 = vmatprep.subr.mxu0 0.0
  %893 = vmatpush1.msra.mxu0 0.0
  %894 = vmatprep.subr.mxu0 0.0
  %895 = vmatpush1.msra.mxu0 0.0
  %896 = vmatprep.subr.mxu0 0.0
  %897 = vmatpush1.msra.mxu0 0.0
  %898 = vmatprep.subr.mxu0 0.0
  %899 = vmatpush1.msra.mxu0 0.0
  %900 = vmatprep.subr.mxu0 0.0
  %901 = vmatpush1.msra.mxu0 0.0
  %902 = vmatprep.subr.mxu0 0.0
  %903 = vmatpush1.msra.mxu0 0.0
  %904 = vmatprep.subr.mxu0 0.0
  %905 = vmatpush1.msra.mxu0 0.0
  %906 = vmatprep.subr.mxu0 0.0
  %907 = vmatpush1.msra.mxu0 0.0
  %908 = vmatprep.subr.mxu0 0.0
  %909 = vmatpush1.msra.mxu0 0.0
  %910 = vmatprep.subr.mxu0 0.0
  %911 = vmatpush1.msra.mxu0 0.0
  %912 = vmatprep.subr.mxu0 0.0
  %913 = vmatpush1.msra.mxu0 0.0
  %914 = vmatprep.mubr.f32.mxu0 0.0
  %v915 = vand.u32 %v473, 4294901760
  %916 = vmatmul.mubr.f32.gmra.mrb[0].mxu0 %v915
  %v917 = vpop.f32.mrb[0].mxu0
  %v918 = vadd.f32 %v846, %v917
  %v919 = vpop.f32.mrb[0].mxu0
  %920 = vdwg.mxu0
  %v921 = vmul.f32 %v471, %v471
  %922 = vmatprep.subr.mxu0 0.0
  %v923 = vand.u32 %v921, 4294901760
  %924 = vmatpush1.msra.mxu0 %v923
  %925 = vmatprep.subr.mxu0 0.0
  %926 = vmatpush1.msra.mxu0 0.0
  %927 = vmatprep.subr.mxu0 0.0
  %928 = vmatpush1.msra.mxu0 0.0
  %929 = vmatprep.subr.mxu0 0.0
  %930 = vmatpush1.msra.mxu0 0.0
  %931 = vmatprep.subr.mxu0 0.0
  %932 = vmatpush1.msra.mxu0 0.0
  %933 = vmatprep.subr.mxu0 0.0
  %934 = vmatpush1.msra.mxu0 0.0
  %935 = vmatprep.subr.mxu0 0.0
  %936 = vmatpush1.msra.mxu0 0.0
  %937 = vmatprep.subr.mxu0 0.0
  %938 = vmatpush1.msra.mxu0 0.0
  %939 = vmatprep.subr.mxu0 0.0
  %940 = vmatpush1.msra.mxu0 0.0
  %941 = vmatprep.subr.mxu0 0.0
  %942 = vmatpush1.msra.mxu0 0.0
  %943 = vmatprep.subr.mxu0 0.0
  %944 = vmatpush1.msra.mxu0 0.0
  %945 = vmatprep.subr.mxu0 0.0
  %946 = vmatpush1.msra.mxu0 0.0
  %947 = vmatprep.subr.mxu0 0.0
  %948 = vmatpush1.msra.mxu0 0.0
  %949 = vmatprep.subr.mxu0 0.0
  %950 = vmatpush1.msra.mxu0 0.0
  %951 = vmatprep.subr.mxu0 0.0
  %952 = vmatpush1.msra.mxu0 0.0
  %953 = vmatprep.subr.mxu0 0.0
  %954 = vmatpush1.msra.mxu0 0.0
  %955 = vmatprep.subr.mxu0 0.0
  %956 = vmatpush1.msra.mxu0 0.0
  %957 = vmatprep.subr.mxu0 0.0
  %958 = vmatpush1.msra.mxu0 0.0
  %959 = vmatprep.subr.mxu0 0.0
  %960 = vmatpush1.msra.mxu0 0.0
  %961 = vmatprep.subr.mxu0 0.0
  %962 = vmatpush1.msra.mxu0 0.0
  %963 = vmatprep.subr.mxu0 0.0
  %964 = vmatpush1.msra.mxu0 0.0
  %965 = vmatprep.subr.mxu0 0.0
  %966 = vmatpush1.msra.mxu0 0.0
  %967 = vmatprep.subr.mxu0 0.0
  %968 = vmatpush1.msra.mxu0 0.0
  %969 = vmatprep.subr.mxu0 0.0
  %970 = vmatpush1.msra.mxu0 0.0
  %971 = vmatprep.subr.mxu0 0.0
  %972 = vmatpush1.msra.mxu0 0.0
  %973 = vmatprep.subr.mxu0 0.0
  %974 = vmatpush1.msra.mxu0 0.0
  %975 = vmatprep.subr.mxu0 0.0
  %976 = vmatpush1.msra.mxu0 0.0
  %977 = vmatprep.subr.mxu0 0.0
  %978 = vmatpush1.msra.mxu0 0.0
  %979 = vmatprep.subr.mxu0 0.0
  %980 = vmatpush1.msra.mxu0 0.0
  %981 = vmatprep.subr.mxu0 0.0
  %982 = vmatpush1.msra.mxu0 0.0
  %983 = vmatprep.subr.mxu0 0.0
  %984 = vmatpush1.msra.mxu0 0.0
  %985 = vmatprep.subr.mxu0 0.0
  %986 = vmatpush1.msra.mxu0 0.0
  %987 = vmatprep.mubr.f32.mxu0 0.0
  %v988 = vand.u32 %v18, 4294901760
  %v989 = vsub.f32 %v18, %v988
  %v990 = vand.u32 %v989, 4294901760
  %v991 = vsub.f32 %v989, %v990
  %v992 = vand.u32 %v991, 4294901760
  %993 = vmatmul.mubr.f32.gmra.mrb[0].mxu0 %v992
  %v994 = vpop.f32.mrb[0].mxu0
  %v995 = vadd.f32 0.0, %v994
  %v996 = vpop.f32.mrb[0].mxu0
  %997 = vdwg.mxu0
  %998 = vmatprep.subr.mxu0 0.0
  %v999 = vand.u32 %v921, 4294901760
  %v1000 = vsub.f32 %v921, %v999
  %v1001 = vand.u32 %v1000, 4294901760
  %v1002 = vsub.f32 %v1000, %v1001
  %v1003 = vand.u32 %v1002, 4294901760
  %1004 = vmatpush1.msra.mxu0 %v1003
  %1005 = vmatprep.subr.mxu0 0.0
  %1006 = vmatpush1.msra.mxu0 0.0
  %1007 = vmatprep.subr.mxu0 0.0
  %1008 = vmatpush1.msra.mxu0 0.0
  %1009 = vmatprep.subr.mxu0 0.0
  %1010 = vmatpush1.msra.mxu0 0.0
  %1011 = vmatprep.subr.mxu0 0.0
  %1012 = vmatpush1.msra.mxu0 0.0
  %1013 = vmatprep.subr.mxu0 0.0
  %1014 = vmatpush1.msra.mxu0 0.0
  %1015 = vmatprep.subr.mxu0 0.0
  %1016 = vmatpush1.msra.mxu0 0.0
  %1017 = vmatprep.subr.mxu0 0.0
  %1018 = vmatpush1.msra.mxu0 0.0
  %1019 = vmatprep.subr.mxu0 0.0
  %1020 = vmatpush1.msra.mxu0 0.0
  %1021 = vmatprep.subr.mxu0 0.0
  %1022 = vmatpush1.msra.mxu0 0.0
  %1023 = vmatprep.subr.mxu0 0.0
  %1024 = vmatpush1.msra.mxu0 0.0
  %1025 = vmatprep.subr.mxu0 0.0
  %1026 = vmatpush1.msra.mxu0 0.0
  %1027 = vmatprep.subr.mxu0 0.0
  %1028 = vmatpush1.msra.mxu0 0.0
  %1029 = vmatprep.subr.mxu0 0.0
  %1030 = vmatpush1.msra.mxu0 0.0
  %1031 = vmatprep.subr.mxu0 0.0
  %1032 = vmatpush1.msra.mxu0 0.0
  %1033 = vmatprep.subr.mxu0 0.0
  %1034 = vmatpush1.msra.mxu0 0.0
  %1035 = vmatprep.subr.mxu0 0.0
  %1036 = vmatpush1.msra.mxu0 0.0
  %1037 = vmatprep.subr.mxu0 0.0
  %1038 = vmatpush1.msra.mxu0 0.0
  %1039 = vmatprep.subr.mxu0 0.0
  %1040 = vmatpush1.msra.mxu0 0.0
  %1041 = vmatprep.subr.mxu0 0.0
  %1042 = vmatpush1.msra.mxu0 0.0
  %1043 = vmatprep.subr.mxu0 0.0
  %1044 = vmatpush1.msra.mxu0 0.0
  %1045 = vmatprep.subr.mxu0 0.0
  %1046 = vmatpush1.msra.mxu0 0.0
  %1047 = vmatprep.subr.mxu0 0.0
  %1048 = vmatpush1.msra.mxu0 0.0
  %1049 = vmatprep.subr.mxu0 0.0
  %1050 = vmatpush1.msra.mxu0 0.0
  %1051 = vmatprep.subr.mxu0 0.0
  %1052 = vmatpush1.msra.mxu0 0.0
  %1053 = vmatprep.subr.mxu0 0.0
  %1054 = vmatpush1.msra.mxu0 0.0
  %1055 = vmatprep.subr.mxu0 0.0
  %1056 = vmatpush1.msra.mxu0 0.0
  %1057 = vmatprep.subr.mxu0 0.0
  %1058 = vmatpush1.msra.mxu0 0.0
  %1059 = vmatprep.subr.mxu0 0.0
  %1060 = vmatpush1.msra.mxu0 0.0
  %1061 = vmatprep.subr.mxu0 0.0
  %1062 = vmatpush1.msra.mxu0 0.0
  %1063 = vmatprep.subr.mxu0 0.0
  %1064 = vmatpush1.msra.mxu0 0.0
  %1065 = vmatprep.subr.mxu0 0.0
  %1066 = vmatpush1.msra.mxu0 0.0
  %1067 = vmatprep.mubr.f32.mxu0 0.0
  %v1068 = vand.u32 %v18, 4294901760
  %1069 = vmatmul.mubr.f32.gmra.mrb[0].mxu0 %v1068
  %v1070 = vpop.f32.mrb[0].mxu0
  %v1071 = vadd.f32 %v995, %v1070
  %v1072 = vpop.f32.mrb[0].mxu0
  %1073 = vdwg.mxu0
  %1074 = vmatprep.subr.mxu0 0.0
  %v1075 = vand.u32 %v921, 4294901760
  %v1076 = vsub.f32 %v921, %v1075
  %1077 = vmatpush1.msra.mxu0 %v1076
  %1078 = vmatprep.subr.mxu0 0.0
  %1079 = vmatpush1.msra.mxu0 0.0
  %1080 = vmatprep.subr.mxu0 0.0
  %1081 = vmatpush1.msra.mxu0 0.0
  %1082 = vmatprep.subr.mxu0 0.0
  %1083 = vmatpush1.msra.mxu0 0.0
  %1084 = vmatprep.subr.mxu0 0.0
  %1085 = vmatpush1.msra.mxu0 0.0
  %1086 = vmatprep.subr.mxu0 0.0
  %1087 = vmatpush1.msra.mxu0 0.0
  %1088 = vmatprep.subr.mxu0 0.0
  %1089 = vmatpush1.msra.mxu0 0.0
  %1090 = vmatprep.subr.mxu0 0.0
  %1091 = vmatpush1.msra.mxu0 0.0
  %1092 = vmatprep.subr.mxu0 0.0
  %1093 = vmatpush1.msra.mxu0 0.0
  %1094 = vmatprep.subr.mxu0 0.0
  %1095 = vmatpush1.msra.mxu0 0.0
  %1096 = vmatprep.subr.mxu0 0.0
  %1097 = vmatpush1.msra.mxu0 0.0
  %1098 = vmatprep.subr.mxu0 0.0
  %1099 = vmatpush1.msra.mxu0 0.0
  %1100 = vmatprep.subr.mxu0 0.0
  %1101 = vmatpush1.msra.mxu0 0.0
  %1102 = vmatprep.subr.mxu0 0.0
  %1103 = vmatpush1.msra.mxu0 0.0
  %1104 = vmatprep.subr.mxu0 0.0
  %1105 = vmatpush1.msra.mxu0 0.0
  %1106 = vmatprep.subr.mxu0 0.0
  %1107 = vmatpush1.msra.mxu0 0.0
  %1108 = vmatprep.subr.mxu0 0.0
  %1109 = vmatpush1.msra.mxu0 0.0
  %1110 = vmatprep.subr.mxu0 0.0
  %1111 = vmatpush1.msra.mxu0 0.0
  %1112 = vmatprep.subr.mxu0 0.0
  %1113 = vmatpush1.msra.mxu0 0.0
  %1114 = vmatprep.subr.mxu0 0.0
  %1115 = vmatpush1.msra.mxu0 0.0
  %1116 = vmatprep.subr.mxu0 0.0
  %1117 = vmatpush1.msra.mxu0 0.0
  %1118 = vmatprep.subr.mxu0 0.0
  %1119 = vmatpush1.msra.mxu0 0.0
  %1120 = vmatprep.subr.mxu0 0.0
  %1121 = vmatpush1.msra.mxu0 0.0
  %1122 = vmatprep.subr.mxu0 0.0
  %1123 = vmatpush1.msra.mxu0 0.0
  %1124 = vmatprep.subr.mxu0 0.0
  %1125 = vmatpush1.msra.mxu0 0.0
  %1126 = vmatprep.subr.mxu0 0.0
  %1127 = vmatpush1.msra.mxu0 0.0
  %1128 = vmatprep.subr.mxu0 0.0
  %1129 = vmatpush1.msra.mxu0 0.0
  %1130 = vmatprep.subr.mxu0 0.0
  %1131 = vmatpush1.msra.mxu0 0.0
  %1132 = vmatprep.subr.mxu0 0.0
  %1133 = vmatpush1.msra.mxu0 0.0
  %1134 = vmatprep.subr.mxu0 0.0
  %1135 = vmatpush1.msra.mxu0 0.0
  %1136 = vmatprep.subr.mxu0 0.0
  %1137 = vmatpush1.msra.mxu0 0.0
  %1138 = vmatprep.subr.mxu0 0.0
  %1139 = vmatpush1.msra.mxu0 0.0
  %1140 = vmatprep.mubr.f32.mxu0 0.0
  %v1141 = vand.u32 %v18, 4294901760
  %v1142 = vsub.f32 %v18, %v1141
  %1143 = vmatmul.mubr.f32.gmra.mrb[0].mxu0 %v1142
  %v1144 = vpop.f32.mrb[0].mxu0
  %v1145 = vadd.f32 %v1071, %v1144
  %v1146 = vpop.f32.mrb[0].mxu0
  %1147 = vdwg.mxu0
  %1148 = vmatprep.subr.mxu0 0.0
  %v1149 = vand.u32 %v921, 4294901760
  %1150 = vmatpush1.msra.mxu0 %v1149
  %1151 = vmatprep.subr.mxu0 0.0
  %1152 = vmatpush1.msra.mxu0 0.0
  %1153 = vmatprep.subr.mxu0 0.0
  %1154 = vmatpush1.msra.mxu0 0.0
  %1155 = vmatprep.subr.mxu0 0.0
  %1156 = vmatpush1.msra.mxu0 0.0
  %1157 = vmatprep.subr.mxu0 0.0
  %1158 = vmatpush1.msra.mxu0 0.0
  %1159 = vmatprep.subr.mxu0 0.0
  %1160 = vmatpush1.msra.mxu0 0.0
  %1161 = vmatprep.subr.mxu0 0.0
  %1162 = vmatpush1.msra.mxu0 0.0
  %1163 = vmatprep.subr.mxu0 0.0
  %1164 = vmatpush1.msra.mxu0 0.0
  %1165 = vmatprep.subr.mxu0 0.0
  %1166 = vmatpush1.msra.mxu0 0.0
  %1167 = vmatprep.subr.mxu0 0.0
  %1168 = vmatpush1.msra.mxu0 0.0
  %1169 = vmatprep.subr.mxu0 0.0
  %1170 = vmatpush1.msra.mxu0 0.0
  %1171 = vmatprep.subr.mxu0 0.0
  %1172 = vmatpush1.msra.mxu0 0.0
  %1173 = vmatprep.subr.mxu0 0.0
  %1174 = vmatpush1.msra.mxu0 0.0
  %1175 = vmatprep.subr.mxu0 0.0
  %1176 = vmatpush1.msra.mxu0 0.0
  %1177 = vmatprep.subr.mxu0 0.0
  %1178 = vmatpush1.msra.mxu0 0.0
  %1179 = vmatprep.subr.mxu0 0.0
  %1180 = vmatpush1.msra.mxu0 0.0
  %1181 = vmatprep.subr.mxu0 0.0
  %1182 = vmatpush1.msra.mxu0 0.0
  %1183 = vmatprep.subr.mxu0 0.0
  %1184 = vmatpush1.msra.mxu0 0.0
  %1185 = vmatprep.subr.mxu0 0.0
  %1186 = vmatpush1.msra.mxu0 0.0
  %1187 = vmatprep.subr.mxu0 0.0
  %1188 = vmatpush1.msra.mxu0 0.0
  %1189 = vmatprep.subr.mxu0 0.0
  %1190 = vmatpush1.msra.mxu0 0.0
  %1191 = vmatprep.subr.mxu0 0.0
  %1192 = vmatpush1.msra.mxu0 0.0
  %1193 = vmatprep.subr.mxu0 0.0
  %1194 = vmatpush1.msra.mxu0 0.0
  %1195 = vmatprep.subr.mxu0 0.0
  %1196 = vmatpush1.msra.mxu0 0.0
  %1197 = vmatprep.subr.mxu0 0.0
  %1198 = vmatpush1.msra.mxu0 0.0
  %1199 = vmatprep.subr.mxu0 0.0
  %1200 = vmatpush1.msra.mxu0 0.0
  %1201 = vmatprep.subr.mxu0 0.0
  %1202 = vmatpush1.msra.mxu0 0.0
  %1203 = vmatprep.subr.mxu0 0.0
  %1204 = vmatpush1.msra.mxu0 0.0
  %1205 = vmatprep.subr.mxu0 0.0
  %1206 = vmatpush1.msra.mxu0 0.0
  %1207 = vmatprep.subr.mxu0 0.0
  %1208 = vmatpush1.msra.mxu0 0.0
  %1209 = vmatprep.subr.mxu0 0.0
  %1210 = vmatpush1.msra.mxu0 0.0
  %1211 = vmatprep.subr.mxu0 0.0
  %1212 = vmatpush1.msra.mxu0 0.0
  %1213 = vmatprep.mubr.f32.mxu0 0.0
  %v1214 = vand.u32 %v18, 4294901760
  %v1215 = vsub.f32 %v18, %v1214
  %v1216 = vand.u32 %v1215, 4294901760
  %1217 = vmatmul.mubr.f32.gmra.mrb[0].mxu0 %v1216
  %v1218 = vpop.f32.mrb[0].mxu0
  %v1219 = vadd.f32 %v1145, %v1218
  %v1220 = vpop.f32.mrb[0].mxu0
  %1221 = vdwg.mxu0
  %1222 = vmatprep.subr.mxu0 0.0
  %v1223 = vand.u32 %v921, 4294901760
  %v1224 = vsub.f32 %v921, %v1223
  %v1225 = vand.u32 %v1224, 4294901760
  %1226 = vmatpush1.msra.mxu0 %v1225
  %1227 = vmatprep.subr.mxu0 0.0
  %1228 = vmatpush1.msra.mxu0 0.0
  %1229 = vmatprep.subr.mxu0 0.0
  %1230 = vmatpush1.msra.mxu0 0.0
  %1231 = vmatprep.subr.mxu0 0.0
  %1232 = vmatpush1.msra.mxu0 0.0
  %1233 = vmatprep.subr.mxu0 0.0
  %1234 = vmatpush1.msra.mxu0 0.0
  %1235 = vmatprep.subr.mxu0 0.0
  %1236 = vmatpush1.msra.mxu0 0.0
  %1237 = vmatprep.subr.mxu0 0.0
  %1238 = vmatpush1.msra.mxu0 0.0
  %1239 = vmatprep.subr.mxu0 0.0
  %1240 = vmatpush1.msra.mxu0 0.0
  %1241 = vmatprep.subr.mxu0 0.0
  %1242 = vmatpush1.msra.mxu0 0.0
  %1243 = vmatprep.subr.mxu0 0.0
  %1244 = vmatpush1.msra.mxu0 0.0
  %1245 = vmatprep.subr.mxu0 0.0
  %1246 = vmatpush1.msra.mxu0 0.0
  %1247 = vmatprep.subr.mxu0 0.0
  %1248 = vmatpush1.msra.mxu0 0.0
  %1249 = vmatprep.subr.mxu0 0.0
  %1250 = vmatpush1.msra.mxu0 0.0
  %1251 = vmatprep.subr.mxu0 0.0
  %1252 = vmatpush1.msra.mxu0 0.0
  %1253 = vmatprep.subr.mxu0 0.0
  %1254 = vmatpush1.msra.mxu0 0.0
  %1255 = vmatprep.subr.mxu0 0.0
  %1256 = vmatpush1.msra.mxu0 0.0
  %1257 = vmatprep.subr.mxu0 0.0
  %1258 = vmatpush1.msra.mxu0 0.0
  %1259 = vmatprep.subr.mxu0 0.0
  %1260 = vmatpush1.msra.mxu0 0.0
  %1261 = vmatprep.subr.mxu0 0.0
  %1262 = vmatpush1.msra.mxu0 0.0
  %1263 = vmatprep.subr.mxu0 0.0
  %1264 = vmatpush1.msra.mxu0 0.0
  %1265 = vmatprep.subr.mxu0 0.0
  %1266 = vmatpush1.msra.mxu0 0.0
  %1267 = vmatprep.subr.mxu0 0.0
  %1268 = vmatpush1.msra.mxu0 0.0
  %1269 = vmatprep.subr.mxu0 0.0
  %1270 = vmatpush1.msra.mxu0 0.0
  %1271 = vmatprep.subr.mxu0 0.0
  %1272 = vmatpush1.msra.mxu0 0.0
  %1273 = vmatprep.subr.mxu0 0.0
  %1274 = vmatpush1.msra.mxu0 0.0
  %1275 = vmatprep.subr.mxu0 0.0
  %1276 = vmatpush1.msra.mxu0 0.0
  %1277 = vmatprep.subr.mxu0 0.0
  %1278 = vmatpush1.msra.mxu0 0.0
  %1279 = vmatprep.subr.mxu0 0.0
  %1280 = vmatpush1.msra.mxu0 0.0
  %1281 = vmatprep.subr.mxu0 0.0
  %1282 = vmatpush1.msra.mxu0 0.0
  %1283 = vmatprep.subr.mxu0 0.0
  %1284 = vmatpush1.msra.mxu0 0.0
  %1285 = vmatprep.subr.mxu0 0.0
  %1286 = vmatpush1.msra.mxu0 0.0
  %1287 = vmatprep.subr.mxu0 0.0
  %1288 = vmatpush1.msra.mxu0 0.0
  %1289 = vmatprep.mubr.f32.mxu0 0.0
  %v1290 = vand.u32 %v18, 4294901760
  %1291 = vmatmul.mubr.f32.gmra.mrb[0].mxu0 %v1290
  %v1292 = vpop.f32.mrb[0].mxu0
  %v1293 = vadd.f32 %v1219, %v1292
  %v1294 = vpop.f32.mrb[0].mxu0
  %1295 = vdwg.mxu0
  %1296 = vmatprep.subr.mxu0 0.0
  %v1297 = vand.u32 %v921, 4294901760
  %1298 = vmatpush1.msra.mxu0 %v1297
  %1299 = vmatprep.subr.mxu0 0.0
  %1300 = vmatpush1.msra.mxu0 0.0
  %1301 = vmatprep.subr.mxu0 0.0
  %1302 = vmatpush1.msra.mxu0 0.0
  %1303 = vmatprep.subr.mxu0 0.0
  %1304 = vmatpush1.msra.mxu0 0.0
  %1305 = vmatprep.subr.mxu0 0.0
  %1306 = vmatpush1.msra.mxu0 0.0
  %1307 = vmatprep.subr.mxu0 0.0
  %1308 = vmatpush1.msra.mxu0 0.0
  %1309 = vmatprep.subr.mxu0 0.0
  %1310 = vmatpush1.msra.mxu0 0.0
  %1311 = vmatprep.subr.mxu0 0.0
  %1312 = vmatpush1.msra.mxu0 0.0
  %1313 = vmatprep.subr.mxu0 0.0
  %1314 = vmatpush1.msra.mxu0 0.0
  %1315 = vmatprep.subr.mxu0 0.0
  %1316 = vmatpush1.msra.mxu0 0.0
  %1317 = vmatprep.subr.mxu0 0.0
  %1318 = vmatpush1.msra.mxu0 0.0
  %1319 = vmatprep.subr.mxu0 0.0
  %1320 = vmatpush1.msra.mxu0 0.0
  %1321 = vmatprep.subr.mxu0 0.0
  %1322 = vmatpush1.msra.mxu0 0.0
  %1323 = vmatprep.subr.mxu0 0.0
  %1324 = vmatpush1.msra.mxu0 0.0
  %1325 = vmatprep.subr.mxu0 0.0
  %1326 = vmatpush1.msra.mxu0 0.0
  %1327 = vmatprep.subr.mxu0 0.0
  %1328 = vmatpush1.msra.mxu0 0.0
  %1329 = vmatprep.subr.mxu0 0.0
  %1330 = vmatpush1.msra.mxu0 0.0
  %1331 = vmatprep.subr.mxu0 0.0
  %1332 = vmatpush1.msra.mxu0 0.0
  %1333 = vmatprep.subr.mxu0 0.0
  %1334 = vmatpush1.msra.mxu0 0.0
  %1335 = vmatprep.subr.mxu0 0.0
  %1336 = vmatpush1.msra.mxu0 0.0
  %1337 = vmatprep.subr.mxu0 0.0
  %1338 = vmatpush1.msra.mxu0 0.0
  %1339 = vmatprep.subr.mxu0 0.0
  %1340 = vmatpush1.msra.mxu0 0.0
  %1341 = vmatprep.subr.mxu0 0.0
  %1342 = vmatpush1.msra.mxu0 0.0
  %1343 = vmatprep.subr.mxu0 0.0
  %1344 = vmatpush1.msra.mxu0 0.0
  %1345 = vmatprep.subr.mxu0 0.0
  %1346 = vmatpush1.msra.mxu0 0.0
  %1347 = vmatprep.subr.mxu0 0.0
  %1348 = vmatpush1.msra.mxu0 0.0
  %1349 = vmatprep.subr.mxu0 0.0
  %1350 = vmatpush1.msra.mxu0 0.0
  %1351 = vmatprep.subr.mxu0 0.0
  %1352 = vmatpush1.msra.mxu0 0.0
  %1353 = vmatprep.subr.mxu0 0.0
  %1354 = vmatpush1.msra.mxu0 0.0
  %1355 = vmatprep.subr.mxu0 0.0
  %1356 = vmatpush1.msra.mxu0 0.0
  %1357 = vmatprep.subr.mxu0 0.0
  %1358 = vmatpush1.msra.mxu0 0.0
  %1359 = vmatprep.subr.mxu0 0.0
  %1360 = vmatpush1.msra.mxu0 0.0
  %1361 = vmatprep.mubr.f32.mxu0 0.0
  %v1362 = vand.u32 %v18, 4294901760
  %1363 = vmatmul.mubr.f32.gmra.mrb[0].mxu0 %v1362
  %v1364 = vpop.f32.mrb[0].mxu0
  %v1365 = vadd.f32 %v1293, %v1364
  %v1366 = vpop.f32.mrb[0].mxu0
  %1367 = vdwg.mxu0
  %v1368 = vrsqrt.pop %v1365
  %v1369 = vmul.f32 %v918, %v1368
  %v1370 = vadd.f32 %v1369, 1.0
  %v1371 = vmul.f32 %v1370, 0.5
  %vm1372 = vcmp.ne.f32.partialorder %v1371, %v1371
  %v1373 = vsel %vm1372, 0.0, %v1371
  %v1374 = vmax.f32 %v1373, -3.4028235e+38
  %v1375 = vmin.f32 %v1374, 3.4028235e+38
  %v1376 = vsub.f32 1.0, %v1375
  %v1377 = vmul.f32 %v1376, 0.1
  %v1378 = vadd.f32 %v1377, 0.45
  %v1379 = vld [vmem:[%s2] sm:$0x1]
  %vm1380 = vcmp.ge.f32.partialorder %v1379, %v1378
  %v1381 = vsel %vm1380, 1, 0
  %v1382 = vcvt.s32.f32 %v1381
  %vm1383 = vcmask 253952
  %1384 = vst.msk [vmem:[%s3] sm:$0x1] %vm1383, %v1382
  // Predicated region
  $region14: #{hybrid_dropout.2} parent=0 // pred_check
    _
  $region15: #{hybrid_dropout.2} parent=0 // pred_check_branch
    %1386 = sbr.rel (0) target = $region17
  $region16: #{hybrid_dropout.2} parent=0 // pred_region
    _
  $region17: #{hybrid_dropout.2} parent=0 // pred_fallthru
    _
  // Predicated region
  $region18: #{hybrid_dropout.2} parent=0 // pred_check
    _
  $region19: #{hybrid_dropout.2} parent=0 // pred_check_branch
    %1388 = sbr.rel (0) target = $region21
  $region20: #{hybrid_dropout.2} parent=0 // pred_region
    _
  $region21: #{hybrid_dropout.2} parent=0 // pred_fallthru
    _

</llo_original>
